<compile_context>
chip_gen: v5e
topology: v5e:2x2
jax: 0.10.0
libtpu: 0.0.40
codegen_flags: <defaults>
</compile_context>

<pallas_src>
import functools

import jax
import jax.numpy as jnp
from jax.experimental import pallas as pl
from jax.experimental.pallas import tpu as pltpu

VISION_DIM = 256   # LSTM input_size
MEMORY_DIM = 256   # LSTM hidden_size


def lstm_step_kernel(x_ref, h_ref, c_ref, w_ref, b_ref, h_out_ref, c_out_ref):
    H = h_ref.shape[-1]

    # Fused operand [x | h] in bf16 (cast before concat -> half the copy bytes),
    # single MXU matmul over the fused (D+H, 4H) bf16 weight, f32 accumulation.
    xh = jnp.concatenate(
        [x_ref[...].astype(jnp.bfloat16), h_ref[...].astype(jnp.bfloat16)], axis=-1)
    gates = jnp.dot(xh, w_ref[...], preferred_element_type=jnp.float32) + b_ref[...]

    # Gate nonlinearities and state update in f32 (exact; EUP transcendentals are
    # effectively free at this size on all generations).
    i = jax.nn.sigmoid(gates[:, 0 * H:1 * H])
    f = jax.nn.sigmoid(gates[:, 1 * H:2 * H])
    g = jnp.tanh(gates[:, 2 * H:3 * H])
    o = jax.nn.sigmoid(gates[:, 3 * H:4 * H])

    c_new = f * c_ref[...] + i * g          # c_ref fully read before aliased write
    h_new = o * jnp.tanh(c_new)

    h_out_ref[...] = h_new                  # aliased with h_ref
    c_out_ref[...] = c_new                  # aliased with c_ref


# jit + buffer donation: h/c are updated genuinely in place (no XLA defensive copies)
# and the eager per-call dispatch overhead around this ~1 us kernel is removed.
@functools.partial(jax.jit, donate_argnums=(1, 2))
def lstm_step_pallas(x, h, c, w_fused, b):
    B, H = h.shape
    D = x.shape[1]
    vmem = pl.BlockSpec(memory_space=pltpu.MemorySpace.VMEM)

    cost = pl.CostEstimate(
        flops=2 * B * (D + H) * 4 * H,                         # one fused matmul
        transcendentals=5 * B * H,                             # 3 sigmoid + 2 tanh
        bytes_accessed=((D + H) * 4 * H * 2                    # bf16 fused weight
                        + 4 * H * 4                            # f32 bias
                        + B * D * 4                            # x
                        + 4 * B * H * 4),                      # h,c in + h,c out
    )

    h_new, c_new = pl.pallas_call(
        lstm_step_kernel,
        out_shape=(
            jax.ShapeDtypeStruct((B, H), jnp.float32),
            jax.ShapeDtypeStruct((B, H), jnp.float32),
        ),
        in_specs=[vmem, vmem, vmem, vmem, vmem],   # x, h, c, w_fused, b
        out_specs=(vmem, vmem),
        # In-place state update: h_in -> h_out, c_in -> c_out.
        input_output_aliases={1: 0, 2: 1},
        cost_estimate=cost,
    )(x, h, c, w_fused, b)
    return h_new, c_new


class MemoryModelPallas:
    """Mirrors the PyTorch MemoryModel: one-layer LSTM applied to a single timestep."""

    def __init__(self, key):
        k1, k2, k3, k4 = jax.random.split(key, 4)
        bound = float(1.0 / (MEMORY_DIM ** 0.5))
        # PyTorch nn.LSTM parameter shapes: W_ih (4H, D), W_hh (4H, H), b_ih/b_hh (4H,)
        w_ih = jax.random.uniform(k1, (4 * MEMORY_DIM, VISION_DIM), jnp.float32, -bound, bound)
        w_hh = jax.random.uniform(k2, (4 * MEMORY_DIM, MEMORY_DIM), jnp.float32, -bound, bound)
        b_ih = jax.random.uniform(k3, (4 * MEMORY_DIM,), jnp.float32, -bound, bound)
        b_hh = jax.random.uniform(k4, (4 * MEMORY_DIM,), jnp.float32, -bound, bound)
        # Fused, pre-transposed weight so  gates = [x | h] @ W_fused + b.
        w_fused_f32 = jnp.concatenate([jnp.transpose(w_ih), jnp.transpose(w_hh)], axis=0)
        self.w_fused = w_fused_f32.astype(jnp.bfloat16)        # (D+H, 4H) bf16
        self.b = (b_ih + b_hh).reshape(1, 4 * MEMORY_DIM)      # (1, 4H)   f32

    def __call__(self, x, hidden_state):
        # x: (B, VISION_DIM);  hidden_state = (h, c), each (1, B, MEMORY_DIM)
        h0, c0 = hidden_state
        B = x.shape[0]
        h_new, c_new = lstm_step_pallas(
            x, h0.reshape(B, MEMORY_DIM), c0.reshape(B, MEMORY_DIM),
            self.w_fused, self.b)
        # PyTorch returns: output.squeeze(0) -> (B, H), and (h_n, c_n) each (1, B, H)
        return h_new, (h_new[None], c_new[None])


def _reference(x, h0, c0, w_fused_bf16, b):
    """Pure-JAX reference with the same bf16 rounding of the matmul operands."""
    H = MEMORY_DIM
    xh = jnp.concatenate([x.astype(jnp.bfloat16), h0.astype(jnp.bfloat16)],
                         axis=-1).astype(jnp.float32)
    w = w_fused_bf16.astype(jnp.float32)
    gates = xh @ w + b
    i = jax.nn.sigmoid(gates[:, 0 * H:1 * H])
    f = jax.nn.sigmoid(gates[:, 1 * H:2 * H])
    g = jnp.tanh(gates[:, 2 * H:3 * H])
    o = jax.nn.sigmoid(gates[:, 3 * H:4 * H])
    c_new = f * c0 + i * g
    h_new = o * jnp.tanh(c_new)
    return h_new, c_new


if __name__ == "__main__":
    key = jax.random.PRNGKey(0)
    k_model, k_x = jax.random.split(key)

    model = MemoryModelPallas(k_model)

    # Batch = 1, matching the module's global hidden_state of shape (1, 1, 256).
    B = 1
    x = jax.random.normal(k_x, (B, VISION_DIM), jnp.float32)
    hidden_state = (jnp.zeros((1, B, MEMORY_DIM), jnp.float32),
                    jnp.zeros((1, B, MEMORY_DIM), jnp.float32))

    # Reference computed first (hidden-state buffers are donated by the jitted step).
    ref_h, ref_c = _reference(x,
                              jnp.zeros((B, MEMORY_DIM), jnp.float32),
                              jnp.zeros((B, MEMORY_DIM), jnp.float32),
                              model.w_fused, model.b)

    out, (h_n, c_n) = model(x, hidden_state)
    out = jax.block_until_ready(out)
    h_n = jax.block_until_ready(h_n)
    c_n = jax.block_until_ready(c_n)

    assert out.shape == (B, MEMORY_DIM)
    assert h_n.shape == (1, B, MEMORY_DIM) and c_n.shape == (1, B, MEMORY_DIM)
    assert jnp.allclose(out, ref_h, atol=1e-3), float(jnp.max(jnp.abs(out - ref_h)))
    assert jnp.allclose(c_n.reshape(B, -1), ref_c, atol=1e-3), \
        float(jnp.max(jnp.abs(c_n.reshape(B, -1) - ref_c)))
    assert jnp.allclose(h_n.reshape(B, -1), out, atol=0.0)

    print("KERNEL_OK")
</pallas_src>

<mosaic_0001>
module attributes {stable_mosaic.version = 11 : i64} {
  func.func @lstm_step_kernel(%arg0: memref<1x256xf32, #tpu.memory_space<vmem>>, %arg1: memref<1x256xf32, #tpu.memory_space<vmem>>, %arg2: memref<1x256xf32, #tpu.memory_space<vmem>>, %arg3: memref<512x1024xbf16, #tpu.memory_space<vmem>>, %arg4: memref<1x1024xf32, #tpu.memory_space<vmem>>, %arg5: memref<1x256xf32, #tpu.memory_space<vmem>>, %arg6: memref<1x256xf32, #tpu.memory_space<vmem>>) attributes {dimension_semantics = [], scalar_prefetch = 0 : i64, scratch_operands = 0 : i64, tpu.core_type = #tpu.core_type<tc>} {
    %c0 = arith.constant 0 : index
    %c0_0 = arith.constant 0 : index
    %0 = vector.load %arg0[%c0, %c0_0] : memref<1x256xf32, #tpu.memory_space<vmem>>, vector<1x256xf32>
    %1 = arith.truncf %0 : vector<1x256xf32> to vector<1x256xbf16>
    %c0_1 = arith.constant 0 : index
    %c0_2 = arith.constant 0 : index
    %2 = vector.load %arg1[%c0_1, %c0_2] : memref<1x256xf32, #tpu.memory_space<vmem>>, vector<1x256xf32>
    %3 = arith.truncf %2 : vector<1x256xf32> to vector<1x256xbf16>
    %4 = tpu.concatenate %1, %3 in 1 : vector<1x256xbf16>, vector<1x256xbf16> -> vector<1x512xbf16>
    %c0_3 = arith.constant 0 : index
    %c0_4 = arith.constant 0 : index
    %5 = vector.load %arg3[%c0_3, %c0_4] : memref<512x1024xbf16, #tpu.memory_space<vmem>>, vector<512x1024xbf16>
    %cst = arith.constant dense<0.000000e+00> : vector<1x1024xf32>
    %6 = tpu.matmul %4, %5, %cst {dimension_numbers = #tpu.dot_dimension_numbers<[1], [0], [0], [1], [0, 0, 1, 1], [], []>} : vector<1x512xbf16>, vector<512x1024xbf16>, vector<1x1024xf32> -> vector<1x1024xf32>
    %c0_5 = arith.constant 0 : index
    %c0_6 = arith.constant 0 : index
    %7 = vector.load %arg4[%c0_5, %c0_6] : memref<1x1024xf32, #tpu.memory_space<vmem>>, vector<1x1024xf32>
    %8 = arith.addf %6, %7 : vector<1x1024xf32>
    %9 = vector.extract_strided_slice %8 {offsets = [0, 0], sizes = [1, 256], strides = [1, 1]} : vector<1x1024xf32> to vector<1x256xf32>
    %10 = arith.negf %9 : vector<1x256xf32>
    %11 = math.exp %10 : vector<1x256xf32>
    %cst_7 = arith.constant 1.000000e+00 : f32
    %12 = vector.broadcast %cst_7 : f32 to vector<1x256xf32>
    %13 = arith.addf %12, %11 : vector<1x256xf32>
    %14 = arith.divf %12, %13 : vector<1x256xf32>
    %15 = vector.extract_strided_slice %8 {offsets = [0, 256], sizes = [1, 256], strides = [1, 1]} : vector<1x1024xf32> to vector<1x256xf32>
    %16 = arith.negf %15 : vector<1x256xf32>
    %17 = math.exp %16 : vector<1x256xf32>
    %cst_8 = arith.constant 1.000000e+00 : f32
    %18 = vector.broadcast %cst_8 : f32 to vector<1x256xf32>
    %19 = arith.addf %18, %17 : vector<1x256xf32>
    %20 = arith.divf %18, %19 : vector<1x256xf32>
    %21 = vector.extract_strided_slice %8 {offsets = [0, 512], sizes = [1, 256], strides = [1, 1]} : vector<1x1024xf32> to vector<1x256xf32>
    %22 = math.tanh %21 : vector<1x256xf32>
    %23 = vector.extract_strided_slice %8 {offsets = [0, 768], sizes = [1, 256], strides = [1, 1]} : vector<1x1024xf32> to vector<1x256xf32>
    %24 = arith.negf %23 : vector<1x256xf32>
    %25 = math.exp %24 : vector<1x256xf32>
    %cst_9 = arith.constant 1.000000e+00 : f32
    %26 = vector.broadcast %cst_9 : f32 to vector<1x256xf32>
    %27 = arith.addf %26, %25 : vector<1x256xf32>
    %28 = arith.divf %26, %27 : vector<1x256xf32>
    %c0_10 = arith.constant 0 : index
    %c0_11 = arith.constant 0 : index
    %29 = vector.load %arg2[%c0_10, %c0_11] : memref<1x256xf32, #tpu.memory_space<vmem>>, vector<1x256xf32>
    %30 = arith.mulf %20, %29 : vector<1x256xf32>
    %31 = arith.mulf %14, %22 : vector<1x256xf32>
    %32 = arith.addf %30, %31 : vector<1x256xf32>
    %33 = math.tanh %32 : vector<1x256xf32>
    %34 = arith.mulf %28, %33 : vector<1x256xf32>
    %c0_12 = arith.constant 0 : index
    %c0_13 = arith.constant 0 : index
    %35 = vector.load %arg5[%c0_12, %c0_13] : memref<1x256xf32, #tpu.memory_space<vmem>>, vector<1x256xf32>
    tpu.vector_store %arg5[%c0_12, %c0_13], %34 {strides = array<i32>} : memref<1x256xf32, #tpu.memory_space<vmem>>, vector<1x256xf32>,
    %c0_14 = arith.constant 0 : index
    %c0_15 = arith.constant 0 : index
    %36 = vector.load %arg6[%c0_14, %c0_15] : memref<1x256xf32, #tpu.memory_space<vmem>>, vector<1x256xf32>
    tpu.vector_store %arg6[%c0_14, %c0_15], %32 {strides = array<i32>} : memref<1x256xf32, #tpu.memory_space<vmem>>, vector<1x256xf32>,
    return
  }
}

</mosaic_0001>

<llo_original>
// kernel: lstm_step_pallas.1
$region0: #{lstm_step_pallas.1}
  #allocation0 [shape = 'u32[]', space=smem, size = 0x4, offset = 0x4, fixed_abs, tag = 'smem constant byte address 0x4 - core index']
  #allocation1 [shape = 'u32[72,128]{1,0:T(1,128)}', space=vmem, size = 0x9000, scoped, tag = 'internal scratch']
  %s0 = inlined_call_operand.hbm [shape: f32[1,256], index: 0, kind: input, shape index: {}]
  %s1 = inlined_call_operand.hbm [shape: f32[1,256], index: 1, kind: input, shape index: {}, may-alias: {1,5}]
  %s2 = inlined_call_operand.hbm [shape: f32[1,256], index: 2, kind: input, shape index: {}, may-alias: {2,6}]
  %s3 = inlined_call_operand.hbm [shape: bf16[512,1024], index: 3, kind: input, shape index: {}]
  %s4 = inlined_call_operand.hbm [shape: f32[1,1024], index: 4, kind: input, shape index: {}]
  %s5 = inlined_call_operand.hbm [shape: f32[1,256], index: 5, kind: output, shape index: {0}, may-alias: {1,5}]
  %s6 = inlined_call_operand.hbm [shape: f32[1,256], index: 6, kind: output, shape index: {1}, may-alias: {2,6}]
  %7 = xla_tuple %s5, %s6
  %s8 = sld [smem:[#allocation0]]
  $region58: #{lstm_step_pallas.1} parent=0
    _
  %s10 = ssub.s32 1, %s8
  %s11 = scalar_select 0, %s10, %s8
  $region1: #{lstm_step_pallas.1} parent=0
    #allocation2 [shape = 'u8[1024]{0}', space=vmem, size = 0x400, scoped, tag = 'input window, operand 0, single buffered']
    #allocation3 [shape = 's32[1]{0}', space=sflag, size = 0x4, scoped, tag = 'scoped memory for lstm_step_pallas.1']
    #allocation4 [shape = 's32[1]{0}', space=sflag, size = 0x4, scoped, tag = 'scoped memory for lstm_step_pallas.1']
    #allocation5 [shape = 'u8[1024]{0}', space=vmem, size = 0x400, scoped, tag = 'input window, operand 1, single buffered']
    #allocation6 [shape = 's32[1]{0}', space=sflag, size = 0x4, scoped, tag = 'scoped memory for lstm_step_pallas.1']
    #allocation7 [shape = 'u8[1024]{0}', space=vmem, size = 0x400, scoped, tag = 'input window, operand 2, single buffered']
    #allocation8 [shape = 'u8[1048576]{0}', space=vmem, size = 0x100000, scoped, tag = 'input window, operand 3, single buffered']
    #allocation9 [shape = 's32[1]{0}', space=sflag, size = 0x4, scoped, tag = 'scoped memory for lstm_step_pallas.1']
    #allocation10 [shape = 'u8[4096]{0}', space=vmem, size = 0x1000, scoped, tag = 'input window, operand 4, single buffered']
    #allocation11 [shape = 'u8[1024]{0}', space=vmem, size = 0x400, scoped, tag = 'output window, operand 0, single buffered']
    #allocation12 [shape = 'u8[1024]{0}', space=vmem, size = 0x400, scoped, tag = 'output window, operand 1, single buffered']
    #allocation13 [shape = 's32[1]{0}', space=sflag, size = 0x4, scoped, tag = 'scoped memory for lstm_step_pallas.1']
    %12 = vsyncpa [#allocation3], 0
    %13 = vsyncpa [#allocation6], 0
    %14 = vsyncpa [#allocation9], 0
    %15 = vsyncpa [#allocation4], 0
    %16 = vsyncpa [#allocation13], 0
    // Predicated region
    $region2: #{lstm_step_pallas.1} parent=1 // pred_check
      _
    $region3: #{lstm_step_pallas.1} parent=1 // pred_check_branch
      %18 = sbr.rel (0) target = $region5
    $region4: #{lstm_step_pallas.1} parent=1 // pred_region
      %20 = vsyncadd [#allocation3], 0
      %s22 = sshll.u32 %s0, 4
      %s23 = int_to_ptr.hbm [resolvable:$true] %s22
      %s24 = sshll.u32 [#allocation2], 4
      %s25 = int_to_ptr.vmem [resolvable:$true] %s24
      %27 = dma.hbm_to_vmem [thread:$0]  %s23, 32, %s25, [#allocation3]
    $region5: #{lstm_step_pallas.1} parent=1 // pred_fallthru
      _
    // Predicated region
    $region6: #{lstm_step_pallas.1} parent=1 // pred_check
      _
    $region7: #{lstm_step_pallas.1} parent=1 // pred_check_branch
      %29 = sbr.rel (0) target = $region9
    $region8: #{lstm_step_pallas.1} parent=1 // pred_region
      %31 = vsyncadd [#allocation6], 0
      %s33 = sshll.u32 %s1, 4
      %s34 = int_to_ptr.hbm [resolvable:$true] %s33
      %s35 = sshll.u32 [#allocation5], 4
      %s36 = int_to_ptr.vmem [resolvable:$true] %s35
      %38 = dma.hbm_to_vmem [thread:$0]  %s34, 32, %s36, [#allocation6]
    $region9: #{lstm_step_pallas.1} parent=1 // pred_fallthru
      _
    // Predicated region
    $region10: #{lstm_step_pallas.1} parent=1 // pred_check
      _
    $region11: #{lstm_step_pallas.1} parent=1 // pred_check_branch
      %40 = sbr.rel (0) target = $region13
    $region12: #{lstm_step_pallas.1} parent=1 // pred_region
      %42 = vsyncadd [#allocation6], 0
      %s44 = sshll.u32 %s2, 4
      %s45 = int_to_ptr.hbm [resolvable:$true] %s44
      %s46 = sshll.u32 [#allocation7], 4
      %s47 = int_to_ptr.vmem [resolvable:$true] %s46
      %49 = dma.hbm_to_vmem [thread:$0]  %s45, 32, %s47, [#allocation6]
    $region13: #{lstm_step_pallas.1} parent=1 // pred_fallthru
      _
    // Predicated region
    $region14: #{lstm_step_pallas.1} parent=1 // pred_check
      _
    $region15: #{lstm_step_pallas.1} parent=1 // pred_check_branch
      %51 = sbr.rel (0) target = $region17
    $region16: #{lstm_step_pallas.1} parent=1 // pred_region
      %53 = vsyncadd [#allocation9], 0
      %s54 = sshll.u32 %s3, 4
      %s55 = int_to_ptr.hbm [resolvable:$true] %s54
      %s56 = sshll.u32 [#allocation8], 4
      %s57 = int_to_ptr.vmem [resolvable:$true] %s56
      %62 = dma.hbm_to_vmem [thread:$0]  %s55, 32768, %s57, [#allocation9], 512, 512, 32
    $region17: #{lstm_step_pallas.1} parent=1 // pred_fallthru
      _
    // Predicated region
    $region18: #{lstm_step_pallas.1} parent=1 // pred_check
      _
    $region19: #{lstm_step_pallas.1} parent=1 // pred_check_branch
      %64 = sbr.rel (0) target = $region21
    $region20: #{lstm_step_pallas.1} parent=1 // pred_region
      %66 = vsyncadd [#allocation9], 0
      %s68 = sshll.u32 %s4, 4
      %s69 = int_to_ptr.hbm [resolvable:$true] %s68
      %s70 = sshll.u32 [#allocation10], 4
      %s71 = int_to_ptr.vmem [resolvable:$true] %s70
      %73 = dma.hbm_to_vmem [thread:$0]  %s69, 128, %s71, [#allocation9]
    $region21: #{lstm_step_pallas.1} parent=1 // pred_fallthru
      _
    // Predicated region
    $region22: #{lstm_step_pallas.1} parent=1 // pred_check
      _
    $region23: #{lstm_step_pallas.1} parent=1 // pred_check_branch
      %75 = sbr.rel (0) target = $region25
    $region24: #{lstm_step_pallas.1} parent=1 // pred_region
      %77 = dma.done [#allocation3], 32
    $region25: #{lstm_step_pallas.1} parent=1 // pred_fallthru
      _
    // Predicated region
    $region26: #{lstm_step_pallas.1} parent=1 // pred_check
      _
    $region27: #{lstm_step_pallas.1} parent=1 // pred_check_branch
      %79 = sbr.rel (0) target = $region29
    $region28: #{lstm_step_pallas.1} parent=1 // pred_region
      %81 = dma.done [#allocation6], 32
    $region29: #{lstm_step_pallas.1} parent=1 // pred_fallthru
      _
    // Predicated region
    $region30: #{lstm_step_pallas.1} parent=1 // pred_check
      _
    $region31: #{lstm_step_pallas.1} parent=1 // pred_check_branch
      %83 = sbr.rel (0) target = $region33
    $region32: #{lstm_step_pallas.1} parent=1 // pred_region
      %85 = dma.done [#allocation6], 32
    $region33: #{lstm_step_pallas.1} parent=1 // pred_fallthru
      _
    // Predicated region
    $region34: #{lstm_step_pallas.1} parent=1 // pred_check
      _
    $region35: #{lstm_step_pallas.1} parent=1 // pred_check_branch
      %87 = sbr.rel (0) target = $region37
    $region36: #{lstm_step_pallas.1} parent=1 // pred_region
      %89 = dma.done [#allocation9], 32768
    $region37: #{lstm_step_pallas.1} parent=1 // pred_fallthru
      _
    // Predicated region
    $region38: #{lstm_step_pallas.1} parent=1 // pred_check
      _
    $region39: #{lstm_step_pallas.1} parent=1 // pred_check_branch
      %91 = sbr.rel (0) target = $region41
    $region40: #{lstm_step_pallas.1} parent=1 // pred_region
      %93 = dma.done [#allocation9], 128
    $region41: #{lstm_step_pallas.1} parent=1 // pred_fallthru
      _
    %v94 = vld [vmem:[#allocation2] sm:$0x3]
    %v96 = vperm.slane %v94, 0
    %v97 = vperm.slane %v94, 1
    %v100 = vpack.c.bf16 %v97, %v96
    %v101 = vld [vmem:[#allocation5] sm:$0x3]
    %v103 = vperm.slane %v101, 0
    %v104 = vperm.slane %v101, 1
    %v107 = vpack.c.bf16 %v104, %v103
    %v109 = vunpack.c.l.b16 %v100
    %v110 = vunpack.c.h.b16 %v100
    %v111 = vpack.c.b16 %v109, %v109
    %v112 = vpack.c.b16 %v110, %v110
    %v116 = vunpack.c.l.b16 %v107
    %v117 = vunpack.c.h.b16 %v107
    %v118 = vpack.c.b16 %v116, %v116
    %v119 = vpack.c.b16 %v117, %v117
    %v122 = vld [vmem:[#allocation8] sm:$0xff]
    %v123 = vld [vmem:[#allocation8 + $0x8] sm:$0xff]
    %v124 = vld [vmem:[#allocation8 + $0x10] sm:$0xff]
    %v125 = vld [vmem:[#allocation8 + $0x18] sm:$0xff]
    %v126 = vld [vmem:[#allocation8 + $0x20] sm:$0xff]
    %v127 = vld [vmem:[#allocation8 + $0x28] sm:$0xff]
    %v128 = vld [vmem:[#allocation8 + $0x30] sm:$0xff]
    %v129 = vld [vmem:[#allocation8 + $0x38] sm:$0xff]
    %v130 = vld [vmem:[#allocation8 + $0x40] sm:$0xff]
    %v131 = vld [vmem:[#allocation8 + $0x48] sm:$0xff]
    %v132 = vld [vmem:[#allocation8 + $0x50] sm:$0xff]
    %v133 = vld [vmem:[#allocation8 + $0x58] sm:$0xff]
    %v134 = vld [vmem:[#allocation8 + $0x60] sm:$0xff]
    %v135 = vld [vmem:[#allocation8 + $0x68] sm:$0xff]
    %v136 = vld [vmem:[#allocation8 + $0x70] sm:$0xff]
    %v137 = vld [vmem:[#allocation8 + $0x78] sm:$0xff]
    %v138 = vld [vmem:[#allocation8 + $0x80] sm:$0xff]
    %v139 = vld [vmem:[#allocation8 + $0x88] sm:$0xff]
    %v140 = vld [vmem:[#allocation8 + $0x90] sm:$0xff]
    %v141 = vld [vmem:[#allocation8 + $0x98] sm:$0xff]
    %v142 = vld [vmem:[#allocation8 + $0xa0] sm:$0xff]
    %v143 = vld [vmem:[#allocation8 + $0xa8] sm:$0xff]
    %v144 = vld [vmem:[#allocation8 + $0xb0] sm:$0xff]
    %v145 = vld [vmem:[#allocation8 + $0xb8] sm:$0xff]
    %v146 = vld [vmem:[#allocation8 + $0xc0] sm:$0xff]
    %v147 = vld [vmem:[#allocation8 + $0xc8] sm:$0xff]
    %v148 = vld [vmem:[#allocation8 + $0xd0] sm:$0xff]
    %v149 = vld [vmem:[#allocation8 + $0xd8] sm:$0xff]
    %v150 = vld [vmem:[#allocation8 + $0xe0] sm:$0xff]
    %v151 = vld [vmem:[#allocation8 + $0xe8] sm:$0xff]
    %v152 = vld [vmem:[#allocation8 + $0xf0] sm:$0xff]
    %v153 = vld [vmem:[#allocation8 + $0xf8] sm:$0xff]
    %v154 = vld [vmem:[#allocation8 + $0x100] sm:$0xff]
    %v155 = vld [vmem:[#allocation8 + $0x108] sm:$0xff]
    %v156 = vld [vmem:[#allocation8 + $0x110] sm:$0xff]
    %v157 = vld [vmem:[#allocation8 + $0x118] sm:$0xff]
    %v158 = vld [vmem:[#allocation8 + $0x120] sm:$0xff]
    %v159 = vld [vmem:[#allocation8 + $0x128] sm:$0xff]
    %v160 = vld [vmem:[#allocation8 + $0x130] sm:$0xff]
    %v161 = vld [vmem:[#allocation8 + $0x138] sm:$0xff]
    %v162 = vld [vmem:[#allocation8 + $0x140] sm:$0xff]
    %v163 = vld [vmem:[#allocation8 + $0x148] sm:$0xff]
    %v164 = vld [vmem:[#allocation8 + $0x150] sm:$0xff]
    %v165 = vld [vmem:[#allocation8 + $0x158] sm:$0xff]
    %v166 = vld [vmem:[#allocation8 + $0x160] sm:$0xff]
    %v167 = vld [vmem:[#allocation8 + $0x168] sm:$0xff]
    %v168 = vld [vmem:[#allocation8 + $0x170] sm:$0xff]
    %v169 = vld [vmem:[#allocation8 + $0x178] sm:$0xff]
    %v170 = vld [vmem:[#allocation8 + $0x180] sm:$0xff]
    %v171 = vld [vmem:[#allocation8 + $0x188] sm:$0xff]
    %v172 = vld [vmem:[#allocation8 + $0x190] sm:$0xff]
    %v173 = vld [vmem:[#allocation8 + $0x198] sm:$0xff]
    %v174 = vld [vmem:[#allocation8 + $0x1a0] sm:$0xff]
    %v175 = vld [vmem:[#allocation8 + $0x1a8] sm:$0xff]
    %v176 = vld [vmem:[#allocation8 + $0x1b0] sm:$0xff]
    %v177 = vld [vmem:[#allocation8 + $0x1b8] sm:$0xff]
    %v178 = vld [vmem:[#allocation8 + $0x1c0] sm:$0xff]
    %v179 = vld [vmem:[#allocation8 + $0x1c8] sm:$0xff]
    %v180 = vld [vmem:[#allocation8 + $0x1d0] sm:$0xff]
    %v181 = vld [vmem:[#allocation8 + $0x1d8] sm:$0xff]
    %v182 = vld [vmem:[#allocation8 + $0x1e0] sm:$0xff]
    %v183 = vld [vmem:[#allocation8 + $0x1e8] sm:$0xff]
    %v184 = vld [vmem:[#allocation8 + $0x1f0] sm:$0xff]
    %v185 = vld [vmem:[#allocation8 + $0x1f8] sm:$0xff]
    %v186 = vld [vmem:[#allocation8 + $0x200] sm:$0xff]
    %v187 = vld [vmem:[#allocation8 + $0x208] sm:$0xff]
    %v188 = vld [vmem:[#allocation8 + $0x210] sm:$0xff]
    %v189 = vld [vmem:[#allocation8 + $0x218] sm:$0xff]
    %v190 = vld [vmem:[#allocation8 + $0x220] sm:$0xff]
    %v191 = vld [vmem:[#allocation8 + $0x228] sm:$0xff]
    %v192 = vld [vmem:[#allocation8 + $0x230] sm:$0xff]
    %v193 = vld [vmem:[#allocation8 + $0x238] sm:$0xff]
    %v194 = vld [vmem:[#allocation8 + $0x240] sm:$0xff]
    %v195 = vld [vmem:[#allocation8 + $0x248] sm:$0xff]
    %v196 = vld [vmem:[#allocation8 + $0x250] sm:$0xff]
    %v197 = vld [vmem:[#allocation8 + $0x258] sm:$0xff]
    %v198 = vld [vmem:[#allocation8 + $0x260] sm:$0xff]
    %v199 = vld [vmem:[#allocation8 + $0x268] sm:$0xff]
    %v200 = vld [vmem:[#allocation8 + $0x270] sm:$0xff]
    %v201 = vld [vmem:[#allocation8 + $0x278] sm:$0xff]
    %v202 = vld [vmem:[#allocation8 + $0x280] sm:$0xff]
    %v203 = vld [vmem:[#allocation8 + $0x288] sm:$0xff]
    %v204 = vld [vmem:[#allocation8 + $0x290] sm:$0xff]
    %v205 = vld [vmem:[#allocation8 + $0x298] sm:$0xff]
    %v206 = vld [vmem:[#allocation8 + $0x2a0] sm:$0xff]
    %v207 = vld [vmem:[#allocation8 + $0x2a8] sm:$0xff]
    %v208 = vld [vmem:[#allocation8 + $0x2b0] sm:$0xff]
    %v209 = vld [vmem:[#allocation8 + $0x2b8] sm:$0xff]
    %v210 = vld [vmem:[#allocation8 + $0x2c0] sm:$0xff]
    %v211 = vld [vmem:[#allocation8 + $0x2c8] sm:$0xff]
    %v212 = vld [vmem:[#allocation8 + $0x2d0] sm:$0xff]
    %v213 = vld [vmem:[#allocation8 + $0x2d8] sm:$0xff]
    %v214 = vld [vmem:[#allocation8 + $0x2e0] sm:$0xff]
    %v215 = vld [vmem:[#allocation8 + $0x2e8] sm:$0xff]
    %v216 = vld [vmem:[#allocation8 + $0x2f0] sm:$0xff]
    %v217 = vld [vmem:[#allocation8 + $0x2f8] sm:$0xff]
    %v218 = vld [vmem:[#allocation8 + $0x300] sm:$0xff]
    %v219 = vld [vmem:[#allocation8 + $0x308] sm:$0xff]
    %v220 = vld [vmem:[#allocation8 + $0x310] sm:$0xff]
    %v221 = vld [vmem:[#allocation8 + $0x318] sm:$0xff]
    %v222 = vld [vmem:[#allocation8 + $0x320] sm:$0xff]
    %v223 = vld [vmem:[#allocation8 + $0x328] sm:$0xff]
    %v224 = vld [vmem:[#allocation8 + $0x330] sm:$0xff]
    %v225 = vld [vmem:[#allocation8 + $0x338] sm:$0xff]
    %v226 = vld [vmem:[#allocation8 + $0x340] sm:$0xff]
    %v227 = vld [vmem:[#allocation8 + $0x348] sm:$0xff]
    %v228 = vld [vmem:[#allocation8 + $0x350] sm:$0xff]
    %v229 = vld [vmem:[#allocation8 + $0x358] sm:$0xff]
    %v230 = vld [vmem:[#allocation8 + $0x360] sm:$0xff]
    %v231 = vld [vmem:[#allocation8 + $0x368] sm:$0xff]
    %v232 = vld [vmem:[#allocation8 + $0x370] sm:$0xff]
    %v233 = vld [vmem:[#allocation8 + $0x378] sm:$0xff]
    %v234 = vld [vmem:[#allocation8 + $0x380] sm:$0xff]
    %v235 = vld [vmem:[#allocation8 + $0x388] sm:$0xff]
    %v236 = vld [vmem:[#allocation8 + $0x390] sm:$0xff]
    %v237 = vld [vmem:[#allocation8 + $0x398] sm:$0xff]
    %v238 = vld [vmem:[#allocation8 + $0x3a0] sm:$0xff]
    %v239 = vld [vmem:[#allocation8 + $0x3a8] sm:$0xff]
    %v240 = vld [vmem:[#allocation8 + $0x3b0] sm:$0xff]
    %v241 = vld [vmem:[#allocation8 + $0x3b8] sm:$0xff]
    %v242 = vld [vmem:[#allocation8 + $0x3c0] sm:$0xff]
    %v243 = vld [vmem:[#allocation8 + $0x3c8] sm:$0xff]
    %v244 = vld [vmem:[#allocation8 + $0x3d0] sm:$0xff]
    %v245 = vld [vmem:[#allocation8 + $0x3d8] sm:$0xff]
    %v246 = vld [vmem:[#allocation8 + $0x3e0] sm:$0xff]
    %v247 = vld [vmem:[#allocation8 + $0x3e8] sm:$0xff]
    %v248 = vld [vmem:[#allocation8 + $0x3f0] sm:$0xff]
    %v249 = vld [vmem:[#allocation8 + $0x3f8] sm:$0xff]
    %v250 = vld [vmem:[#allocation8 + $0x400] sm:$0xff]
    %v251 = vld [vmem:[#allocation8 + $0x408] sm:$0xff]
    %v252 = vld [vmem:[#allocation8 + $0x410] sm:$0xff]
    %v253 = vld [vmem:[#allocation8 + $0x418] sm:$0xff]
    %v254 = vld [vmem:[#allocation8 + $0x420] sm:$0xff]
    %v255 = vld [vmem:[#allocation8 + $0x428] sm:$0xff]
    %v256 = vld [vmem:[#allocation8 + $0x430] sm:$0xff]
    %v257 = vld [vmem:[#allocation8 + $0x438] sm:$0xff]
    %v258 = vld [vmem:[#allocation8 + $0x440] sm:$0xff]
    %v259 = vld [vmem:[#allocation8 + $0x448] sm:$0xff]
    %v260 = vld [vmem:[#allocation8 + $0x450] sm:$0xff]
    %v261 = vld [vmem:[#allocation8 + $0x458] sm:$0xff]
    %v262 = vld [vmem:[#allocation8 + $0x460] sm:$0xff]
    %v263 = vld [vmem:[#allocation8 + $0x468] sm:$0xff]
    %v264 = vld [vmem:[#allocation8 + $0x470] sm:$0xff]
    %v265 = vld [vmem:[#allocation8 + $0x478] sm:$0xff]
    %v266 = vld [vmem:[#allocation8 + $0x480] sm:$0xff]
    %v267 = vld [vmem:[#allocation8 + $0x488] sm:$0xff]
    %v268 = vld [vmem:[#allocation8 + $0x490] sm:$0xff]
    %v269 = vld [vmem:[#allocation8 + $0x498] sm:$0xff]
    %v270 = vld [vmem:[#allocation8 + $0x4a0] sm:$0xff]
    %v271 = vld [vmem:[#allocation8 + $0x4a8] sm:$0xff]
    %v272 = vld [vmem:[#allocation8 + $0x4b0] sm:$0xff]
    %v273 = vld [vmem:[#allocation8 + $0x4b8] sm:$0xff]
    %v274 = vld [vmem:[#allocation8 + $0x4c0] sm:$0xff]
    %v275 = vld [vmem:[#allocation8 + $0x4c8] sm:$0xff]
    %v276 = vld [vmem:[#allocation8 + $0x4d0] sm:$0xff]
    %v277 = vld [vmem:[#allocation8 + $0x4d8] sm:$0xff]
    %v278 = vld [vmem:[#allocation8 + $0x4e0] sm:$0xff]
    %v279 = vld [vmem:[#allocation8 + $0x4e8] sm:$0xff]
    %v280 = vld [vmem:[#allocation8 + $0x4f0] sm:$0xff]
    %v281 = vld [vmem:[#allocation8 + $0x4f8] sm:$0xff]
    %v282 = vld [vmem:[#allocation8 + $0x500] sm:$0xff]
    %v283 = vld [vmem:[#allocation8 + $0x508] sm:$0xff]
    %v284 = vld [vmem:[#allocation8 + $0x510] sm:$0xff]
    %v285 = vld [vmem:[#allocation8 + $0x518] sm:$0xff]
    %v286 = vld [vmem:[#allocation8 + $0x520] sm:$0xff]
    %v287 = vld [vmem:[#allocation8 + $0x528] sm:$0xff]
    %v288 = vld [vmem:[#allocation8 + $0x530] sm:$0xff]
    %v289 = vld [vmem:[#allocation8 + $0x538] sm:$0xff]
    %v290 = vld [vmem:[#allocation8 + $0x540] sm:$0xff]
    %v291 = vld [vmem:[#allocation8 + $0x548] sm:$0xff]
    %v292 = vld [vmem:[#allocation8 + $0x550] sm:$0xff]
    %v293 = vld [vmem:[#allocation8 + $0x558] sm:$0xff]
    %v294 = vld [vmem:[#allocation8 + $0x560] sm:$0xff]
    %v295 = vld [vmem:[#allocation8 + $0x568] sm:$0xff]
    %v296 = vld [vmem:[#allocation8 + $0x570] sm:$0xff]
    %v297 = vld [vmem:[#allocation8 + $0x578] sm:$0xff]
    %v298 = vld [vmem:[#allocation8 + $0x580] sm:$0xff]
    %v299 = vld [vmem:[#allocation8 + $0x588] sm:$0xff]
    %v300 = vld [vmem:[#allocation8 + $0x590] sm:$0xff]
    %v301 = vld [vmem:[#allocation8 + $0x598] sm:$0xff]
    %v302 = vld [vmem:[#allocation8 + $0x5a0] sm:$0xff]
    %v303 = vld [vmem:[#allocation8 + $0x5a8] sm:$0xff]
    %v304 = vld [vmem:[#allocation8 + $0x5b0] sm:$0xff]
    %v305 = vld [vmem:[#allocation8 + $0x5b8] sm:$0xff]
    %v306 = vld [vmem:[#allocation8 + $0x5c0] sm:$0xff]
    %v307 = vld [vmem:[#allocation8 + $0x5c8] sm:$0xff]
    %v308 = vld [vmem:[#allocation8 + $0x5d0] sm:$0xff]
    %v309 = vld [vmem:[#allocation8 + $0x5d8] sm:$0xff]
    %v310 = vld [vmem:[#allocation8 + $0x5e0] sm:$0xff]
    %v311 = vld [vmem:[#allocation8 + $0x5e8] sm:$0xff]
    %v312 = vld [vmem:[#allocation8 + $0x5f0] sm:$0xff]
    %v313 = vld [vmem:[#allocation8 + $0x5f8] sm:$0xff]
    %v314 = vld [vmem:[#allocation8 + $0x600] sm:$0xff]
    %v315 = vld [vmem:[#allocation8 + $0x608] sm:$0xff]
    %v316 = vld [vmem:[#allocation8 + $0x610] sm:$0xff]
    %v317 = vld [vmem:[#allocation8 + $0x618] sm:$0xff]
    %v318 = vld [vmem:[#allocation8 + $0x620] sm:$0xff]
    %v319 = vld [vmem:[#allocation8 + $0x628] sm:$0xff]
    %v320 = vld [vmem:[#allocation8 + $0x630] sm:$0xff]
    %v321 = vld [vmem:[#allocation8 + $0x638] sm:$0xff]
    %v322 = vld [vmem:[#allocation8 + $0x640] sm:$0xff]
    %v323 = vld [vmem:[#allocation8 + $0x648] sm:$0xff]
    %v324 = vld [vmem:[#allocation8 + $0x650] sm:$0xff]
    %v325 = vld [vmem:[#allocation8 + $0x658] sm:$0xff]
    %v326 = vld [vmem:[#allocation8 + $0x660] sm:$0xff]
    %v327 = vld [vmem:[#allocation8 + $0x668] sm:$0xff]
    %v328 = vld [vmem:[#allocation8 + $0x670] sm:$0xff]
    %v329 = vld [vmem:[#allocation8 + $0x678] sm:$0xff]
    %v330 = vld [vmem:[#allocation8 + $0x680] sm:$0xff]
    %v331 = vld [vmem:[#allocation8 + $0x688] sm:$0xff]
    %v332 = vld [vmem:[#allocation8 + $0x690] sm:$0xff]
    %v333 = vld [vmem:[#allocation8 + $0x698] sm:$0xff]
    %v334 = vld [vmem:[#allocation8 + $0x6a0] sm:$0xff]
    %v335 = vld [vmem:[#allocation8 + $0x6a8] sm:$0xff]
    %v336 = vld [vmem:[#allocation8 + $0x6b0] sm:$0xff]
    %v337 = vld [vmem:[#allocation8 + $0x6b8] sm:$0xff]
    %v338 = vld [vmem:[#allocation8 + $0x6c0] sm:$0xff]
    %v339 = vld [vmem:[#allocation8 + $0x6c8] sm:$0xff]
    %v340 = vld [vmem:[#allocation8 + $0x6d0] sm:$0xff]
    %v341 = vld [vmem:[#allocation8 + $0x6d8] sm:$0xff]
    %v342 = vld [vmem:[#allocation8 + $0x6e0] sm:$0xff]
    %v343 = vld [vmem:[#allocation8 + $0x6e8] sm:$0xff]
    %v344 = vld [vmem:[#allocation8 + $0x6f0] sm:$0xff]
    %v345 = vld [vmem:[#allocation8 + $0x6f8] sm:$0xff]
    %v346 = vld [vmem:[#allocation8 + $0x700] sm:$0xff]
    %v347 = vld [vmem:[#allocation8 + $0x708] sm:$0xff]
    %v348 = vld [vmem:[#allocation8 + $0x710] sm:$0xff]
    %v349 = vld [vmem:[#allocation8 + $0x718] sm:$0xff]
    %v350 = vld [vmem:[#allocation8 + $0x720] sm:$0xff]
    %v351 = vld [vmem:[#allocation8 + $0x728] sm:$0xff]
    %v352 = vld [vmem:[#allocation8 + $0x730] sm:$0xff]
    %v353 = vld [vmem:[#allocation8 + $0x738] sm:$0xff]
    %v354 = vld [vmem:[#allocation8 + $0x740] sm:$0xff]
    %v355 = vld [vmem:[#allocation8 + $0x748] sm:$0xff]
    %v356 = vld [vmem:[#allocation8 + $0x750] sm:$0xff]
    %v357 = vld [vmem:[#allocation8 + $0x758] sm:$0xff]
    %v358 = vld [vmem:[#allocation8 + $0x760] sm:$0xff]
    %v359 = vld [vmem:[#allocation8 + $0x768] sm:$0xff]
    %v360 = vld [vmem:[#allocation8 + $0x770] sm:$0xff]
    %v361 = vld [vmem:[#allocation8 + $0x778] sm:$0xff]
    %v362 = vld [vmem:[#allocation8 + $0x780] sm:$0xff]
    %v363 = vld [vmem:[#allocation8 + $0x788] sm:$0xff]
    %v364 = vld [vmem:[#allocation8 + $0x790] sm:$0xff]
    %v365 = vld [vmem:[#allocation8 + $0x798] sm:$0xff]
    %v366 = vld [vmem:[#allocation8 + $0x7a0] sm:$0xff]
    %v367 = vld [vmem:[#allocation8 + $0x7a8] sm:$0xff]
    %v368 = vld [vmem:[#allocation8 + $0x7b0] sm:$0xff]
    %v369 = vld [vmem:[#allocation8 + $0x7b8] sm:$0xff]
    %v370 = vld [vmem:[#allocation8 + $0x7c0] sm:$0xff]
    %v371 = vld [vmem:[#allocation8 + $0x7c8] sm:$0xff]
    %v372 = vld [vmem:[#allocation8 + $0x7d0] sm:$0xff]
    %v373 = vld [vmem:[#allocation8 + $0x7d8] sm:$0xff]
    %v374 = vld [vmem:[#allocation8 + $0x7e0] sm:$0xff]
    %v375 = vld [vmem:[#allocation8 + $0x7e8] sm:$0xff]
    %v376 = vld [vmem:[#allocation8 + $0x7f0] sm:$0xff]
    %v377 = vld [vmem:[#allocation8 + $0x7f8] sm:$0xff]
    %v378 = vld [vmem:[#allocation10] sm:$0xff]
    %v635 = vunpack.c.l.b16 %v122
    %v636 = vunpack.c.h.b16 %v122
    %v637 = vunpack.c.l.b16 %v123
    %v638 = vunpack.c.h.b16 %v123
    %v639 = vunpack.c.l.b16 %v124
    %v640 = vunpack.c.h.b16 %v124
    %v641 = vunpack.c.l.b16 %v125
    %v642 = vunpack.c.h.b16 %v125
    %v643 = vunpack.c.l.b16 %v126
    %v644 = vunpack.c.h.b16 %v126
    %v645 = vunpack.c.l.b16 %v127
    %v646 = vunpack.c.h.b16 %v127
    %v647 = vunpack.c.l.b16 %v128
    %v648 = vunpack.c.h.b16 %v128
    %v649 = vunpack.c.l.b16 %v129
    %v650 = vunpack.c.h.b16 %v129
    %v651 = vunpack.c.l.b16 %v130
    %v652 = vunpack.c.h.b16 %v130
    %v653 = vunpack.c.l.b16 %v131
    %v654 = vunpack.c.h.b16 %v131
    %v655 = vunpack.c.l.b16 %v132
    %v656 = vunpack.c.h.b16 %v132
    %v657 = vunpack.c.l.b16 %v133
    %v658 = vunpack.c.h.b16 %v133
    %v659 = vunpack.c.l.b16 %v134
    %v660 = vunpack.c.h.b16 %v134
    %v661 = vunpack.c.l.b16 %v135
    %v662 = vunpack.c.h.b16 %v135
    %v663 = vunpack.c.l.b16 %v136
    %v664 = vunpack.c.h.b16 %v136
    %v665 = vunpack.c.l.b16 %v137
    %v666 = vunpack.c.h.b16 %v137
    %v667 = vunpack.c.l.b16 %v138
    %v668 = vunpack.c.h.b16 %v138
    %v669 = vunpack.c.l.b16 %v139
    %v670 = vunpack.c.h.b16 %v139
    %v671 = vunpack.c.l.b16 %v140
    %v672 = vunpack.c.h.b16 %v140
    %v673 = vunpack.c.l.b16 %v141
    %v674 = vunpack.c.h.b16 %v141
    %v675 = vunpack.c.l.b16 %v142
    %v676 = vunpack.c.h.b16 %v142
    %v677 = vunpack.c.l.b16 %v143
    %v678 = vunpack.c.h.b16 %v143
    %v679 = vunpack.c.l.b16 %v144
    %v680 = vunpack.c.h.b16 %v144
    %v681 = vunpack.c.l.b16 %v145
    %v682 = vunpack.c.h.b16 %v145
    %v683 = vunpack.c.l.b16 %v146
    %v684 = vunpack.c.h.b16 %v146
    %v685 = vunpack.c.l.b16 %v147
    %v686 = vunpack.c.h.b16 %v147
    %v687 = vunpack.c.l.b16 %v148
    %v688 = vunpack.c.h.b16 %v148
    %v689 = vunpack.c.l.b16 %v149
    %v690 = vunpack.c.h.b16 %v149
    %v691 = vunpack.c.l.b16 %v150
    %v692 = vunpack.c.h.b16 %v150
    %v693 = vunpack.c.l.b16 %v151
    %v694 = vunpack.c.h.b16 %v151
    %v695 = vunpack.c.l.b16 %v152
    %v696 = vunpack.c.h.b16 %v152
    %v697 = vunpack.c.l.b16 %v153
    %v698 = vunpack.c.h.b16 %v153
    %v699 = vunpack.c.l.b16 %v154
    %v700 = vunpack.c.h.b16 %v154
    %v701 = vunpack.c.l.b16 %v155
    %v702 = vunpack.c.h.b16 %v155
    %v703 = vunpack.c.l.b16 %v156
    %v704 = vunpack.c.h.b16 %v156
    %v705 = vunpack.c.l.b16 %v157
    %v706 = vunpack.c.h.b16 %v157
    %v707 = vunpack.c.l.b16 %v158
    %v708 = vunpack.c.h.b16 %v158
    %v709 = vunpack.c.l.b16 %v159
    %v710 = vunpack.c.h.b16 %v159
    %v711 = vunpack.c.l.b16 %v160
    %v712 = vunpack.c.h.b16 %v160
    %v713 = vunpack.c.l.b16 %v161
    %v714 = vunpack.c.h.b16 %v161
    %v715 = vunpack.c.l.b16 %v162
    %v716 = vunpack.c.h.b16 %v162
    %v717 = vunpack.c.l.b16 %v163
    %v718 = vunpack.c.h.b16 %v163
    %v719 = vunpack.c.l.b16 %v164
    %v720 = vunpack.c.h.b16 %v164
    %v721 = vunpack.c.l.b16 %v165
    %v722 = vunpack.c.h.b16 %v165
    %v723 = vunpack.c.l.b16 %v166
    %v724 = vunpack.c.h.b16 %v166
    %v725 = vunpack.c.l.b16 %v167
    %v726 = vunpack.c.h.b16 %v167
    %v727 = vunpack.c.l.b16 %v168
    %v728 = vunpack.c.h.b16 %v168
    %v729 = vunpack.c.l.b16 %v169
    %v730 = vunpack.c.h.b16 %v169
    %v731 = vunpack.c.l.b16 %v170
    %v732 = vunpack.c.h.b16 %v170
    %v733 = vunpack.c.l.b16 %v171
    %v734 = vunpack.c.h.b16 %v171
    %v735 = vunpack.c.l.b16 %v172
    %v736 = vunpack.c.h.b16 %v172
    %v737 = vunpack.c.l.b16 %v173
    %v738 = vunpack.c.h.b16 %v173
    %v739 = vunpack.c.l.b16 %v174
    %v740 = vunpack.c.h.b16 %v174
    %v741 = vunpack.c.l.b16 %v175
    %v742 = vunpack.c.h.b16 %v175
    %v743 = vunpack.c.l.b16 %v176
    %v744 = vunpack.c.h.b16 %v176
    %v745 = vunpack.c.l.b16 %v177
    %v746 = vunpack.c.h.b16 %v177
    %v747 = vunpack.c.l.b16 %v178
    %v748 = vunpack.c.h.b16 %v178
    %v749 = vunpack.c.l.b16 %v179
    %v750 = vunpack.c.h.b16 %v179
    %v751 = vunpack.c.l.b16 %v180
    %v752 = vunpack.c.h.b16 %v180
    %v753 = vunpack.c.l.b16 %v181
    %v754 = vunpack.c.h.b16 %v181
    %v755 = vunpack.c.l.b16 %v182
    %v756 = vunpack.c.h.b16 %v182
    %v757 = vunpack.c.l.b16 %v183
    %v758 = vunpack.c.h.b16 %v183
    %v759 = vunpack.c.l.b16 %v184
    %v760 = vunpack.c.h.b16 %v184
    %v761 = vunpack.c.l.b16 %v185
    %v762 = vunpack.c.h.b16 %v185
    %v763 = vunpack.c.l.b16 %v186
    %v764 = vunpack.c.h.b16 %v186
    %v765 = vunpack.c.l.b16 %v187
    %v766 = vunpack.c.h.b16 %v187
    %v767 = vunpack.c.l.b16 %v188
    %v768 = vunpack.c.h.b16 %v188
    %v769 = vunpack.c.l.b16 %v189
    %v770 = vunpack.c.h.b16 %v189
    %v771 = vunpack.c.l.b16 %v190
    %v772 = vunpack.c.h.b16 %v190
    %v773 = vunpack.c.l.b16 %v191
    %v774 = vunpack.c.h.b16 %v191
    %v775 = vunpack.c.l.b16 %v192
    %v776 = vunpack.c.h.b16 %v192
    %v777 = vunpack.c.l.b16 %v193
    %v778 = vunpack.c.h.b16 %v193
    %v779 = vunpack.c.l.b16 %v194
    %v780 = vunpack.c.h.b16 %v194
    %v781 = vunpack.c.l.b16 %v195
    %v782 = vunpack.c.h.b16 %v195
    %v783 = vunpack.c.l.b16 %v196
    %v784 = vunpack.c.h.b16 %v196
    %v785 = vunpack.c.l.b16 %v197
    %v786 = vunpack.c.h.b16 %v197
    %v787 = vunpack.c.l.b16 %v198
    %v788 = vunpack.c.h.b16 %v198
    %v789 = vunpack.c.l.b16 %v199
    %v790 = vunpack.c.h.b16 %v199
    %v791 = vunpack.c.l.b16 %v200
    %v792 = vunpack.c.h.b16 %v200
    %v793 = vunpack.c.l.b16 %v201
    %v794 = vunpack.c.h.b16 %v201
    %v795 = vunpack.c.l.b16 %v202
    %v796 = vunpack.c.h.b16 %v202
    %v797 = vunpack.c.l.b16 %v203
    %v798 = vunpack.c.h.b16 %v203
    %v799 = vunpack.c.l.b16 %v204
    %v800 = vunpack.c.h.b16 %v204
    %v801 = vunpack.c.l.b16 %v205
    %v802 = vunpack.c.h.b16 %v205
    %v803 = vunpack.c.l.b16 %v206
    %v804 = vunpack.c.h.b16 %v206
    %v805 = vunpack.c.l.b16 %v207
    %v806 = vunpack.c.h.b16 %v207
    %v807 = vunpack.c.l.b16 %v208
    %v808 = vunpack.c.h.b16 %v208
    %v809 = vunpack.c.l.b16 %v209
    %v810 = vunpack.c.h.b16 %v209
    %v811 = vunpack.c.l.b16 %v210
    %v812 = vunpack.c.h.b16 %v210
    %v813 = vunpack.c.l.b16 %v211
    %v814 = vunpack.c.h.b16 %v211
    %v815 = vunpack.c.l.b16 %v212
    %v816 = vunpack.c.h.b16 %v212
    %v817 = vunpack.c.l.b16 %v213
    %v818 = vunpack.c.h.b16 %v213
    %v819 = vunpack.c.l.b16 %v214
    %v820 = vunpack.c.h.b16 %v214
    %v821 = vunpack.c.l.b16 %v215
    %v822 = vunpack.c.h.b16 %v215
    %v823 = vunpack.c.l.b16 %v216
    %v824 = vunpack.c.h.b16 %v216
    %v825 = vunpack.c.l.b16 %v217
    %v826 = vunpack.c.h.b16 %v217
    %v827 = vunpack.c.l.b16 %v218
    %v828 = vunpack.c.h.b16 %v218
    %v829 = vunpack.c.l.b16 %v219
    %v830 = vunpack.c.h.b16 %v219
    %v831 = vunpack.c.l.b16 %v220
    %v832 = vunpack.c.h.b16 %v220
    %v833 = vunpack.c.l.b16 %v221
    %v834 = vunpack.c.h.b16 %v221
    %v835 = vunpack.c.l.b16 %v222
    %v836 = vunpack.c.h.b16 %v222
    %v837 = vunpack.c.l.b16 %v223
    %v838 = vunpack.c.h.b16 %v223
    %v839 = vunpack.c.l.b16 %v224
    %v840 = vunpack.c.h.b16 %v224
    %v841 = vunpack.c.l.b16 %v225
    %v842 = vunpack.c.h.b16 %v225
    %v843 = vunpack.c.l.b16 %v226
    %v844 = vunpack.c.h.b16 %v226
    %v845 = vunpack.c.l.b16 %v227
    %v846 = vunpack.c.h.b16 %v227
    %v847 = vunpack.c.l.b16 %v228
    %v848 = vunpack.c.h.b16 %v228
    %v849 = vunpack.c.l.b16 %v229
    %v850 = vunpack.c.h.b16 %v229
    %v851 = vunpack.c.l.b16 %v230
    %v852 = vunpack.c.h.b16 %v230
    %v853 = vunpack.c.l.b16 %v231
    %v854 = vunpack.c.h.b16 %v231
    %v855 = vunpack.c.l.b16 %v232
    %v856 = vunpack.c.h.b16 %v232
    %v857 = vunpack.c.l.b16 %v233
    %v858 = vunpack.c.h.b16 %v233
    %v859 = vunpack.c.l.b16 %v234
    %v860 = vunpack.c.h.b16 %v234
    %v861 = vunpack.c.l.b16 %v235
    %v862 = vunpack.c.h.b16 %v235
    %v863 = vunpack.c.l.b16 %v236
    %v864 = vunpack.c.h.b16 %v236
    %v865 = vunpack.c.l.b16 %v237
    %v866 = vunpack.c.h.b16 %v237
    %v867 = vunpack.c.l.b16 %v238
    %v868 = vunpack.c.h.b16 %v238
    %v869 = vunpack.c.l.b16 %v239
    %v870 = vunpack.c.h.b16 %v239
    %v871 = vunpack.c.l.b16 %v240
    %v872 = vunpack.c.h.b16 %v240
    %v873 = vunpack.c.l.b16 %v241
    %v874 = vunpack.c.h.b16 %v241
    %v875 = vunpack.c.l.b16 %v242
    %v876 = vunpack.c.h.b16 %v242
    %v877 = vunpack.c.l.b16 %v243
    %v878 = vunpack.c.h.b16 %v243
    %v879 = vunpack.c.l.b16 %v244
    %v880 = vunpack.c.h.b16 %v244
    %v881 = vunpack.c.l.b16 %v245
    %v882 = vunpack.c.h.b16 %v245
    %v883 = vunpack.c.l.b16 %v246
    %v884 = vunpack.c.h.b16 %v246
    %v885 = vunpack.c.l.b16 %v247
    %v886 = vunpack.c.h.b16 %v247
    %v887 = vunpack.c.l.b16 %v248
    %v888 = vunpack.c.h.b16 %v248
    %v889 = vunpack.c.l.b16 %v249
    %v890 = vunpack.c.h.b16 %v249
    %v891 = vunpack.c.l.b16 %v250
    %v892 = vunpack.c.h.b16 %v250
    %v893 = vunpack.c.l.b16 %v251
    %v894 = vunpack.c.h.b16 %v251
    %v895 = vunpack.c.l.b16 %v252
    %v896 = vunpack.c.h.b16 %v252
    %v897 = vunpack.c.l.b16 %v253
    %v898 = vunpack.c.h.b16 %v253
    %v899 = vunpack.c.l.b16 %v254
    %v900 = vunpack.c.h.b16 %v254
    %v901 = vunpack.c.l.b16 %v255
    %v902 = vunpack.c.h.b16 %v255
    %v903 = vunpack.c.l.b16 %v256
    %v904 = vunpack.c.h.b16 %v256
    %v905 = vunpack.c.l.b16 %v257
    %v906 = vunpack.c.h.b16 %v257
    %v907 = vunpack.c.l.b16 %v258
    %v908 = vunpack.c.h.b16 %v258
    %v909 = vunpack.c.l.b16 %v259
    %v910 = vunpack.c.h.b16 %v259
    %v911 = vunpack.c.l.b16 %v260
    %v912 = vunpack.c.h.b16 %v260
    %v913 = vunpack.c.l.b16 %v261
    %v914 = vunpack.c.h.b16 %v261
    %v915 = vunpack.c.l.b16 %v262
    %v916 = vunpack.c.h.b16 %v262
    %v917 = vunpack.c.l.b16 %v263
    %v918 = vunpack.c.h.b16 %v263
    %v919 = vunpack.c.l.b16 %v264
    %v920 = vunpack.c.h.b16 %v264
    %v921 = vunpack.c.l.b16 %v265
    %v922 = vunpack.c.h.b16 %v265
    %v923 = vunpack.c.l.b16 %v266
    %v924 = vunpack.c.h.b16 %v266
    %v925 = vunpack.c.l.b16 %v267
    %v926 = vunpack.c.h.b16 %v267
    %v927 = vunpack.c.l.b16 %v268
    %v928 = vunpack.c.h.b16 %v268
    %v929 = vunpack.c.l.b16 %v269
    %v930 = vunpack.c.h.b16 %v269
    %v931 = vunpack.c.l.b16 %v270
    %v932 = vunpack.c.h.b16 %v270
    %v933 = vunpack.c.l.b16 %v271
    %v934 = vunpack.c.h.b16 %v271
    %v935 = vunpack.c.l.b16 %v272
    %v936 = vunpack.c.h.b16 %v272
    %v937 = vunpack.c.l.b16 %v273
    %v938 = vunpack.c.h.b16 %v273
    %v939 = vunpack.c.l.b16 %v274
    %v940 = vunpack.c.h.b16 %v274
    %v941 = vunpack.c.l.b16 %v275
    %v942 = vunpack.c.h.b16 %v275
    %v943 = vunpack.c.l.b16 %v276
    %v944 = vunpack.c.h.b16 %v276
    %v945 = vunpack.c.l.b16 %v277
    %v946 = vunpack.c.h.b16 %v277
    %v947 = vunpack.c.l.b16 %v278
    %v948 = vunpack.c.h.b16 %v278
    %v949 = vunpack.c.l.b16 %v279
    %v950 = vunpack.c.h.b16 %v279
    %v951 = vunpack.c.l.b16 %v280
    %v952 = vunpack.c.h.b16 %v280
    %v953 = vunpack.c.l.b16 %v281
    %v954 = vunpack.c.h.b16 %v281
    %v955 = vunpack.c.l.b16 %v282
    %v956 = vunpack.c.h.b16 %v282
    %v957 = vunpack.c.l.b16 %v283
    %v958 = vunpack.c.h.b16 %v283
    %v959 = vunpack.c.l.b16 %v284
    %v960 = vunpack.c.h.b16 %v284
    %v961 = vunpack.c.l.b16 %v285
    %v962 = vunpack.c.h.b16 %v285
    %v963 = vunpack.c.l.b16 %v286
    %v964 = vunpack.c.h.b16 %v286
    %v965 = vunpack.c.l.b16 %v287
    %v966 = vunpack.c.h.b16 %v287
    %v967 = vunpack.c.l.b16 %v288
    %v968 = vunpack.c.h.b16 %v288
    %v969 = vunpack.c.l.b16 %v289
    %v970 = vunpack.c.h.b16 %v289
    %v971 = vunpack.c.l.b16 %v290
    %v972 = vunpack.c.h.b16 %v290
    %v973 = vunpack.c.l.b16 %v291
    %v974 = vunpack.c.h.b16 %v291
    %v975 = vunpack.c.l.b16 %v292
    %v976 = vunpack.c.h.b16 %v292
    %v977 = vunpack.c.l.b16 %v293
    %v978 = vunpack.c.h.b16 %v293
    %v979 = vunpack.c.l.b16 %v294
    %v980 = vunpack.c.h.b16 %v294
    %v981 = vunpack.c.l.b16 %v295
    %v982 = vunpack.c.h.b16 %v295
    %v983 = vunpack.c.l.b16 %v296
    %v984 = vunpack.c.h.b16 %v296
    %v985 = vunpack.c.l.b16 %v297
    %v986 = vunpack.c.h.b16 %v297
    %v987 = vunpack.c.l.b16 %v298
    %v988 = vunpack.c.h.b16 %v298
    %v989 = vunpack.c.l.b16 %v299
    %v990 = vunpack.c.h.b16 %v299
    %v991 = vunpack.c.l.b16 %v300
    %v992 = vunpack.c.h.b16 %v300
    %v993 = vunpack.c.l.b16 %v301
    %v994 = vunpack.c.h.b16 %v301
    %v995 = vunpack.c.l.b16 %v302
    %v996 = vunpack.c.h.b16 %v302
    %v997 = vunpack.c.l.b16 %v303
    %v998 = vunpack.c.h.b16 %v303
    %v999 = vunpack.c.l.b16 %v304
    %v1000 = vunpack.c.h.b16 %v304
    %v1001 = vunpack.c.l.b16 %v305
    %v1002 = vunpack.c.h.b16 %v305
    %v1003 = vunpack.c.l.b16 %v306
    %v1004 = vunpack.c.h.b16 %v306
    %v1005 = vunpack.c.l.b16 %v307
    %v1006 = vunpack.c.h.b16 %v307
    %v1007 = vunpack.c.l.b16 %v308
    %v1008 = vunpack.c.h.b16 %v308
    %v1009 = vunpack.c.l.b16 %v309
    %v1010 = vunpack.c.h.b16 %v309
    %v1011 = vunpack.c.l.b16 %v310
    %v1012 = vunpack.c.h.b16 %v310
    %v1013 = vunpack.c.l.b16 %v311
    %v1014 = vunpack.c.h.b16 %v311
    %v1015 = vunpack.c.l.b16 %v312
    %v1016 = vunpack.c.h.b16 %v312
    %v1017 = vunpack.c.l.b16 %v313
    %v1018 = vunpack.c.h.b16 %v313
    %v1019 = vunpack.c.l.b16 %v314
    %v1020 = vunpack.c.h.b16 %v314
    %v1021 = vunpack.c.l.b16 %v315
    %v1022 = vunpack.c.h.b16 %v315
    %v1023 = vunpack.c.l.b16 %v316
    %v1024 = vunpack.c.h.b16 %v316
    %v1025 = vunpack.c.l.b16 %v317
    %v1026 = vunpack.c.h.b16 %v317
    %v1027 = vunpack.c.l.b16 %v318
    %v1028 = vunpack.c.h.b16 %v318
    %v1029 = vunpack.c.l.b16 %v319
    %v1030 = vunpack.c.h.b16 %v319
    %v1031 = vunpack.c.l.b16 %v320
    %v1032 = vunpack.c.h.b16 %v320
    %v1033 = vunpack.c.l.b16 %v321
    %v1034 = vunpack.c.h.b16 %v321
    %v1035 = vunpack.c.l.b16 %v322
    %v1036 = vunpack.c.h.b16 %v322
    %v1037 = vunpack.c.l.b16 %v323
    %v1038 = vunpack.c.h.b16 %v323
    %v1039 = vunpack.c.l.b16 %v324
    %v1040 = vunpack.c.h.b16 %v324
    %v1041 = vunpack.c.l.b16 %v325
    %v1042 = vunpack.c.h.b16 %v325
    %v1043 = vunpack.c.l.b16 %v326
    %v1044 = vunpack.c.h.b16 %v326
    %v1045 = vunpack.c.l.b16 %v327
    %v1046 = vunpack.c.h.b16 %v327
    %v1047 = vunpack.c.l.b16 %v328
    %v1048 = vunpack.c.h.b16 %v328
    %v1049 = vunpack.c.l.b16 %v329
    %v1050 = vunpack.c.h.b16 %v329
    %v1051 = vunpack.c.l.b16 %v330
    %v1052 = vunpack.c.h.b16 %v330
    %v1053 = vunpack.c.l.b16 %v331
    %v1054 = vunpack.c.h.b16 %v331
    %v1055 = vunpack.c.l.b16 %v332
    %v1056 = vunpack.c.h.b16 %v332
    %v1057 = vunpack.c.l.b16 %v333
    %v1058 = vunpack.c.h.b16 %v333
    %v1059 = vunpack.c.l.b16 %v334
    %v1060 = vunpack.c.h.b16 %v334
    %v1061 = vunpack.c.l.b16 %v335
    %v1062 = vunpack.c.h.b16 %v335
    %v1063 = vunpack.c.l.b16 %v336
    %v1064 = vunpack.c.h.b16 %v336
    %v1065 = vunpack.c.l.b16 %v337
    %v1066 = vunpack.c.h.b16 %v337
    %v1067 = vunpack.c.l.b16 %v338
    %v1068 = vunpack.c.h.b16 %v338
    %v1069 = vunpack.c.l.b16 %v339
    %v1070 = vunpack.c.h.b16 %v339
    %v1071 = vunpack.c.l.b16 %v340
    %v1072 = vunpack.c.h.b16 %v340
    %v1073 = vunpack.c.l.b16 %v341
    %v1074 = vunpack.c.h.b16 %v341
    %v1075 = vunpack.c.l.b16 %v342
    %v1076 = vunpack.c.h.b16 %v342
    %v1077 = vunpack.c.l.b16 %v343
    %v1078 = vunpack.c.h.b16 %v343
    %v1079 = vunpack.c.l.b16 %v344
    %v1080 = vunpack.c.h.b16 %v344
    %v1081 = vunpack.c.l.b16 %v345
    %v1082 = vunpack.c.h.b16 %v345
    %v1083 = vunpack.c.l.b16 %v346
    %v1084 = vunpack.c.h.b16 %v346
    %v1085 = vunpack.c.l.b16 %v347
    %v1086 = vunpack.c.h.b16 %v347
    %v1087 = vunpack.c.l.b16 %v348
    %v1088 = vunpack.c.h.b16 %v348
    %v1089 = vunpack.c.l.b16 %v349
    %v1090 = vunpack.c.h.b16 %v349
    %v1091 = vunpack.c.l.b16 %v350
    %v1092 = vunpack.c.h.b16 %v350
    %v1093 = vunpack.c.l.b16 %v351
    %v1094 = vunpack.c.h.b16 %v351
    %v1095 = vunpack.c.l.b16 %v352
    %v1096 = vunpack.c.h.b16 %v352
    %v1097 = vunpack.c.l.b16 %v353
    %v1098 = vunpack.c.h.b16 %v353
    %v1099 = vunpack.c.l.b16 %v354
    %v1100 = vunpack.c.h.b16 %v354
    %v1101 = vunpack.c.l.b16 %v355
    %v1102 = vunpack.c.h.b16 %v355
    %v1103 = vunpack.c.l.b16 %v356
    %v1104 = vunpack.c.h.b16 %v356
    %v1105 = vunpack.c.l.b16 %v357
    %v1106 = vunpack.c.h.b16 %v357
    %v1107 = vunpack.c.l.b16 %v358
    %v1108 = vunpack.c.h.b16 %v358
    %v1109 = vunpack.c.l.b16 %v359
    %v1110 = vunpack.c.h.b16 %v359
    %v1111 = vunpack.c.l.b16 %v360
    %v1112 = vunpack.c.h.b16 %v360
    %v1113 = vunpack.c.l.b16 %v361
    %v1114 = vunpack.c.h.b16 %v361
    %v1115 = vunpack.c.l.b16 %v362
    %v1116 = vunpack.c.h.b16 %v362
    %v1117 = vunpack.c.l.b16 %v363
    %v1118 = vunpack.c.h.b16 %v363
    %v1119 = vunpack.c.l.b16 %v364
    %v1120 = vunpack.c.h.b16 %v364
    %v1121 = vunpack.c.l.b16 %v365
    %v1122 = vunpack.c.h.b16 %v365
    %v1123 = vunpack.c.l.b16 %v366
    %v1124 = vunpack.c.h.b16 %v366
    %v1125 = vunpack.c.l.b16 %v367
    %v1126 = vunpack.c.h.b16 %v367
    %v1127 = vunpack.c.l.b16 %v368
    %v1128 = vunpack.c.h.b16 %v368
    %v1129 = vunpack.c.l.b16 %v369
    %v1130 = vunpack.c.h.b16 %v369
    %v1131 = vunpack.c.l.b16 %v370
    %v1132 = vunpack.c.h.b16 %v370
    %v1133 = vunpack.c.l.b16 %v371
    %v1134 = vunpack.c.h.b16 %v371
    %v1135 = vunpack.c.l.b16 %v372
    %v1136 = vunpack.c.h.b16 %v372
    %v1137 = vunpack.c.l.b16 %v373
    %v1138 = vunpack.c.h.b16 %v373
    %v1139 = vunpack.c.l.b16 %v374
    %v1140 = vunpack.c.h.b16 %v374
    %v1141 = vunpack.c.l.b16 %v375
    %v1142 = vunpack.c.h.b16 %v375
    %v1143 = vunpack.c.l.b16 %v376
    %v1144 = vunpack.c.h.b16 %v376
    %v1145 = vunpack.c.l.b16 %v377
    %v1146 = vunpack.c.h.b16 %v377
    %v1147 = vpack.c.b16 %v643, %v635
    %v1148 = vpack.c.b16 %v644, %v636
    %v1149 = vpack.c.b16 %v645, %v637
    %v1150 = vpack.c.b16 %v646, %v638
    %v1151 = vpack.c.b16 %v647, %v639
    %v1152 = vpack.c.b16 %v648, %v640
    %v1153 = vpack.c.b16 %v649, %v641
    %v1154 = vpack.c.b16 %v650, %v642
    %v1155 = vpack.c.b16 %v659, %v651
    %v1156 = vpack.c.b16 %v660, %v652
    %v1157 = vpack.c.b16 %v661, %v653
    %v1158 = vpack.c.b16 %v662, %v654
    %v1159 = vpack.c.b16 %v663, %v655
    %v1160 = vpack.c.b16 %v664, %v656
    %v1161 = vpack.c.b16 %v665, %v657
    %v1162 = vpack.c.b16 %v666, %v658
    %v1163 = vpack.c.b16 %v675, %v667
    %v1164 = vpack.c.b16 %v676, %v668
    %v1165 = vpack.c.b16 %v677, %v669
    %v1166 = vpack.c.b16 %v678, %v670
    %v1167 = vpack.c.b16 %v679, %v671
    %v1168 = vpack.c.b16 %v680, %v672
    %v1169 = vpack.c.b16 %v681, %v673
    %v1170 = vpack.c.b16 %v682, %v674
    %v1171 = vpack.c.b16 %v691, %v683
    %v1172 = vpack.c.b16 %v692, %v684
    %v1173 = vpack.c.b16 %v693, %v685
    %v1174 = vpack.c.b16 %v694, %v686
    %v1175 = vpack.c.b16 %v695, %v687
    %v1176 = vpack.c.b16 %v696, %v688
    %v1177 = vpack.c.b16 %v697, %v689
    %v1178 = vpack.c.b16 %v698, %v690
    %v1179 = vpack.c.b16 %v707, %v699
    %v1180 = vpack.c.b16 %v708, %v700
    %v1181 = vpack.c.b16 %v709, %v701
    %v1182 = vpack.c.b16 %v710, %v702
    %v1183 = vpack.c.b16 %v711, %v703
    %v1184 = vpack.c.b16 %v712, %v704
    %v1185 = vpack.c.b16 %v713, %v705
    %v1186 = vpack.c.b16 %v714, %v706
    %v1187 = vpack.c.b16 %v723, %v715
    %v1188 = vpack.c.b16 %v724, %v716
    %v1189 = vpack.c.b16 %v725, %v717
    %v1190 = vpack.c.b16 %v726, %v718
    %v1191 = vpack.c.b16 %v727, %v719
    %v1192 = vpack.c.b16 %v728, %v720
    %v1193 = vpack.c.b16 %v729, %v721
    %v1194 = vpack.c.b16 %v730, %v722
    %v1195 = vpack.c.b16 %v739, %v731
    %v1196 = vpack.c.b16 %v740, %v732
    %v1197 = vpack.c.b16 %v741, %v733
    %v1198 = vpack.c.b16 %v742, %v734
    %v1199 = vpack.c.b16 %v743, %v735
    %v1200 = vpack.c.b16 %v744, %v736
    %v1201 = vpack.c.b16 %v745, %v737
    %v1202 = vpack.c.b16 %v746, %v738
    %v1203 = vpack.c.b16 %v755, %v747
    %v1204 = vpack.c.b16 %v756, %v748
    %v1205 = vpack.c.b16 %v757, %v749
    %v1206 = vpack.c.b16 %v758, %v750
    %v1207 = vpack.c.b16 %v759, %v751
    %v1208 = vpack.c.b16 %v760, %v752
    %v1209 = vpack.c.b16 %v761, %v753
    %v1210 = vpack.c.b16 %v762, %v754
    %v1211 = vpack.c.b16 %v771, %v763
    %v1212 = vpack.c.b16 %v772, %v764
    %v1213 = vpack.c.b16 %v773, %v765
    %v1214 = vpack.c.b16 %v774, %v766
    %v1215 = vpack.c.b16 %v775, %v767
    %v1216 = vpack.c.b16 %v776, %v768
    %v1217 = vpack.c.b16 %v777, %v769
    %v1218 = vpack.c.b16 %v778, %v770
    %v1219 = vpack.c.b16 %v787, %v779
    %v1220 = vpack.c.b16 %v788, %v780
    %v1221 = vpack.c.b16 %v789, %v781
    %v1222 = vpack.c.b16 %v790, %v782
    %v1223 = vpack.c.b16 %v791, %v783
    %v1224 = vpack.c.b16 %v792, %v784
    %v1225 = vpack.c.b16 %v793, %v785
    %v1226 = vpack.c.b16 %v794, %v786
    %v1227 = vpack.c.b16 %v803, %v795
    %v1228 = vpack.c.b16 %v804, %v796
    %v1229 = vpack.c.b16 %v805, %v797
    %v1230 = vpack.c.b16 %v806, %v798
    %v1231 = vpack.c.b16 %v807, %v799
    %v1232 = vpack.c.b16 %v808, %v800
    %v1233 = vpack.c.b16 %v809, %v801
    %v1234 = vpack.c.b16 %v810, %v802
    %v1235 = vpack.c.b16 %v819, %v811
    %v1236 = vpack.c.b16 %v820, %v812
    %v1237 = vpack.c.b16 %v821, %v813
    %v1238 = vpack.c.b16 %v822, %v814
    %v1239 = vpack.c.b16 %v823, %v815
    %v1240 = vpack.c.b16 %v824, %v816
    %v1241 = vpack.c.b16 %v825, %v817
    %v1242 = vpack.c.b16 %v826, %v818
    %v1243 = vpack.c.b16 %v835, %v827
    %v1244 = vpack.c.b16 %v836, %v828
    %v1245 = vpack.c.b16 %v837, %v829
    %v1246 = vpack.c.b16 %v838, %v830
    %v1247 = vpack.c.b16 %v839, %v831
    %v1248 = vpack.c.b16 %v840, %v832
    %v1249 = vpack.c.b16 %v841, %v833
    %v1250 = vpack.c.b16 %v842, %v834
    %v1251 = vpack.c.b16 %v851, %v843
    %v1252 = vpack.c.b16 %v852, %v844
    %v1253 = vpack.c.b16 %v853, %v845
    %v1254 = vpack.c.b16 %v854, %v846
    %v1255 = vpack.c.b16 %v855, %v847
    %v1256 = vpack.c.b16 %v856, %v848
    %v1257 = vpack.c.b16 %v857, %v849
    %v1258 = vpack.c.b16 %v858, %v850
    %v1259 = vpack.c.b16 %v867, %v859
    %v1260 = vpack.c.b16 %v868, %v860
    %v1261 = vpack.c.b16 %v869, %v861
    %v1262 = vpack.c.b16 %v870, %v862
    %v1263 = vpack.c.b16 %v871, %v863
    %v1264 = vpack.c.b16 %v872, %v864
    %v1265 = vpack.c.b16 %v873, %v865
    %v1266 = vpack.c.b16 %v874, %v866
    %v1267 = vpack.c.b16 %v883, %v875
    %v1268 = vpack.c.b16 %v884, %v876
    %v1269 = vpack.c.b16 %v885, %v877
    %v1270 = vpack.c.b16 %v886, %v878
    %v1271 = vpack.c.b16 %v887, %v879
    %v1272 = vpack.c.b16 %v888, %v880
    %v1273 = vpack.c.b16 %v889, %v881
    %v1274 = vpack.c.b16 %v890, %v882
    %v1275 = vpack.c.b16 %v899, %v891
    %v1276 = vpack.c.b16 %v900, %v892
    %v1277 = vpack.c.b16 %v901, %v893
    %v1278 = vpack.c.b16 %v902, %v894
    %v1279 = vpack.c.b16 %v903, %v895
    %v1280 = vpack.c.b16 %v904, %v896
    %v1281 = vpack.c.b16 %v905, %v897
    %v1282 = vpack.c.b16 %v906, %v898
    %v1283 = vpack.c.b16 %v915, %v907
    %v1284 = vpack.c.b16 %v916, %v908
    %v1285 = vpack.c.b16 %v917, %v909
    %v1286 = vpack.c.b16 %v918, %v910
    %v1287 = vpack.c.b16 %v919, %v911
    %v1288 = vpack.c.b16 %v920, %v912
    %v1289 = vpack.c.b16 %v921, %v913
    %v1290 = vpack.c.b16 %v922, %v914
    %v1291 = vpack.c.b16 %v931, %v923
    %v1292 = vpack.c.b16 %v932, %v924
    %v1293 = vpack.c.b16 %v933, %v925
    %v1294 = vpack.c.b16 %v934, %v926
    %v1295 = vpack.c.b16 %v935, %v927
    %v1296 = vpack.c.b16 %v936, %v928
    %v1297 = vpack.c.b16 %v937, %v929
    %v1298 = vpack.c.b16 %v938, %v930
    %v1299 = vpack.c.b16 %v947, %v939
    %v1300 = vpack.c.b16 %v948, %v940
    %v1301 = vpack.c.b16 %v949, %v941
    %v1302 = vpack.c.b16 %v950, %v942
    %v1303 = vpack.c.b16 %v951, %v943
    %v1304 = vpack.c.b16 %v952, %v944
    %v1305 = vpack.c.b16 %v953, %v945
    %v1306 = vpack.c.b16 %v954, %v946
    %v1307 = vpack.c.b16 %v963, %v955
    %v1308 = vpack.c.b16 %v964, %v956
    %v1309 = vpack.c.b16 %v965, %v957
    %v1310 = vpack.c.b16 %v966, %v958
    %v1311 = vpack.c.b16 %v967, %v959
    %v1312 = vpack.c.b16 %v968, %v960
    %v1313 = vpack.c.b16 %v969, %v961
    %v1314 = vpack.c.b16 %v970, %v962
    %v1315 = vpack.c.b16 %v979, %v971
    %v1316 = vpack.c.b16 %v980, %v972
    %v1317 = vpack.c.b16 %v981, %v973
    %v1318 = vpack.c.b16 %v982, %v974
    %v1319 = vpack.c.b16 %v983, %v975
    %v1320 = vpack.c.b16 %v984, %v976
    %v1321 = vpack.c.b16 %v985, %v977
    %v1322 = vpack.c.b16 %v986, %v978
    %v1323 = vpack.c.b16 %v995, %v987
    %v1324 = vpack.c.b16 %v996, %v988
    %v1325 = vpack.c.b16 %v997, %v989
    %v1326 = vpack.c.b16 %v998, %v990
    %v1327 = vpack.c.b16 %v999, %v991
    %v1328 = vpack.c.b16 %v1000, %v992
    %v1329 = vpack.c.b16 %v1001, %v993
    %v1330 = vpack.c.b16 %v1002, %v994
    %v1331 = vpack.c.b16 %v1011, %v1003
    %v1332 = vpack.c.b16 %v1012, %v1004
    %v1333 = vpack.c.b16 %v1013, %v1005
    %v1334 = vpack.c.b16 %v1014, %v1006
    %v1335 = vpack.c.b16 %v1015, %v1007
    %v1336 = vpack.c.b16 %v1016, %v1008
    %v1337 = vpack.c.b16 %v1017, %v1009
    %v1338 = vpack.c.b16 %v1018, %v1010
    %v1339 = vpack.c.b16 %v1027, %v1019
    %v1340 = vpack.c.b16 %v1028, %v1020
    %v1341 = vpack.c.b16 %v1029, %v1021
    %v1342 = vpack.c.b16 %v1030, %v1022
    %v1343 = vpack.c.b16 %v1031, %v1023
    %v1344 = vpack.c.b16 %v1032, %v1024
    %v1345 = vpack.c.b16 %v1033, %v1025
    %v1346 = vpack.c.b16 %v1034, %v1026
    %v1347 = vpack.c.b16 %v1043, %v1035
    %v1348 = vpack.c.b16 %v1044, %v1036
    %v1349 = vpack.c.b16 %v1045, %v1037
    %v1350 = vpack.c.b16 %v1046, %v1038
    %v1351 = vpack.c.b16 %v1047, %v1039
    %v1352 = vpack.c.b16 %v1048, %v1040
    %v1353 = vpack.c.b16 %v1049, %v1041
    %v1354 = vpack.c.b16 %v1050, %v1042
    %v1355 = vpack.c.b16 %v1059, %v1051
    %v1356 = vpack.c.b16 %v1060, %v1052
    %v1357 = vpack.c.b16 %v1061, %v1053
    %v1358 = vpack.c.b16 %v1062, %v1054
    %v1359 = vpack.c.b16 %v1063, %v1055
    %v1360 = vpack.c.b16 %v1064, %v1056
    %v1361 = vpack.c.b16 %v1065, %v1057
    %v1362 = vpack.c.b16 %v1066, %v1058
    %v1363 = vpack.c.b16 %v1075, %v1067
    %v1364 = vpack.c.b16 %v1076, %v1068
    %v1365 = vpack.c.b16 %v1077, %v1069
    %v1366 = vpack.c.b16 %v1078, %v1070
    %v1367 = vpack.c.b16 %v1079, %v1071
    %v1368 = vpack.c.b16 %v1080, %v1072
    %v1369 = vpack.c.b16 %v1081, %v1073
    %v1370 = vpack.c.b16 %v1082, %v1074
    %v1371 = vpack.c.b16 %v1091, %v1083
    %v1372 = vpack.c.b16 %v1092, %v1084
    %v1373 = vpack.c.b16 %v1093, %v1085
    %v1374 = vpack.c.b16 %v1094, %v1086
    %v1375 = vpack.c.b16 %v1095, %v1087
    %v1376 = vpack.c.b16 %v1096, %v1088
    %v1377 = vpack.c.b16 %v1097, %v1089
    %v1378 = vpack.c.b16 %v1098, %v1090
    %v1379 = vpack.c.b16 %v1107, %v1099
    %v1380 = vpack.c.b16 %v1108, %v1100
    %v1381 = vpack.c.b16 %v1109, %v1101
    %v1382 = vpack.c.b16 %v1110, %v1102
    %v1383 = vpack.c.b16 %v1111, %v1103
    %v1384 = vpack.c.b16 %v1112, %v1104
    %v1385 = vpack.c.b16 %v1113, %v1105
    %v1386 = vpack.c.b16 %v1114, %v1106
    %v1387 = vpack.c.b16 %v1123, %v1115
    %v1388 = vpack.c.b16 %v1124, %v1116
    %v1389 = vpack.c.b16 %v1125, %v1117
    %v1390 = vpack.c.b16 %v1126, %v1118
    %v1391 = vpack.c.b16 %v1127, %v1119
    %v1392 = vpack.c.b16 %v1128, %v1120
    %v1393 = vpack.c.b16 %v1129, %v1121
    %v1394 = vpack.c.b16 %v1130, %v1122
    %v1395 = vpack.c.b16 %v1139, %v1131
    %v1396 = vpack.c.b16 %v1140, %v1132
    %v1397 = vpack.c.b16 %v1141, %v1133
    %v1398 = vpack.c.b16 %v1142, %v1134
    %v1399 = vpack.c.b16 %v1143, %v1135
    %v1400 = vpack.c.b16 %v1144, %v1136
    %v1401 = vpack.c.b16 %v1145, %v1137
    %v1402 = vpack.c.b16 %v1146, %v1138
    %v1660 = vperm.slane %v378, 0
    %v1661 = vperm.slane %v378, 1
    %v1662 = vperm.slane %v378, 2
    %v1663 = vperm.slane %v378, 3
    %v1664 = vperm.slane %v378, 4
    %v1665 = vperm.slane %v378, 5
    %v1666 = vperm.slane %v378, 6
    %v1667 = vperm.slane %v378, 7
    %1676 = vmatpush.bf16.msra.mxu0 %v1203
    %1677 = vmatpush.bf16.msra.mxu0 %v1195
    %1678 = vmatpush.bf16.msra.mxu0 %v1187
    %1679 = vmatpush.bf16.msra.mxu0 %v1179
    %1680 = vmatpush.bf16.msra.mxu0 %v1171
    %1681 = vmatpush.bf16.msra.mxu0 %v1163
    %1682 = vmatpush.bf16.msra.mxu0 %v1155
    %1683 = vmatpush.bf16.msra.mxu0 %v1147
    %1684 = vmatmul.bf16.gmra.mxu0 %v111
    %v1685 = vpop.f32.mrf.mxu0
    %v1686 = vadd.f32 %v1660, %v1685
    %v1687 = vpop.f32.mrf.mxu0
    %1688 = vdwg.mxu0
    %1689 = vmatpush.bf16.msra.mxu0 %v1267
    %1690 = vmatpush.bf16.msra.mxu0 %v1259
    %1691 = vmatpush.bf16.msra.mxu0 %v1251
    %1692 = vmatpush.bf16.msra.mxu0 %v1243
    %1693 = vmatpush.bf16.msra.mxu0 %v1235
    %1694 = vmatpush.bf16.msra.mxu0 %v1227
    %1695 = vmatpush.bf16.msra.mxu0 %v1219
    %1696 = vmatpush.bf16.msra.mxu0 %v1211
    %1697 = vmatmul.bf16.gmra.mxu0 %v112
    %v1698 = vpop.f32.mrf.mxu0
    %v1699 = vadd.f32 %v1686, %v1698
    %v1700 = vpop.f32.mrf.mxu0
    %1701 = vdwg.mxu0
    %1702 = vmatpush.bf16.msra.mxu0 %v1331
    %1703 = vmatpush.bf16.msra.mxu0 %v1323
    %1704 = vmatpush.bf16.msra.mxu0 %v1315
    %1705 = vmatpush.bf16.msra.mxu0 %v1307
    %1706 = vmatpush.bf16.msra.mxu0 %v1299
    %1707 = vmatpush.bf16.msra.mxu0 %v1291
    %1708 = vmatpush.bf16.msra.mxu0 %v1283
    %1709 = vmatpush.bf16.msra.mxu0 %v1275
    %1710 = vmatmul.bf16.gmra.mxu0 %v118
    %v1711 = vpop.f32.mrf.mxu0
    %v1712 = vadd.f32 %v1699, %v1711
    %v1713 = vpop.f32.mrf.mxu0
    %1714 = vdwg.mxu0
    %1715 = vmatpush.bf16.msra.mxu0 %v1395
    %1716 = vmatpush.bf16.msra.mxu0 %v1387
    %1717 = vmatpush.bf16.msra.mxu0 %v1379
    %1718 = vmatpush.bf16.msra.mxu0 %v1371
    %1719 = vmatpush.bf16.msra.mxu0 %v1363
    %1720 = vmatpush.bf16.msra.mxu0 %v1355
    %1721 = vmatpush.bf16.msra.mxu0 %v1347
    %1722 = vmatpush.bf16.msra.mxu0 %v1339
    %1723 = vmatmul.bf16.gmra.mxu0 %v119
    %v1724 = vpop.f32.mrf.mxu0
    %v1725 = vadd.f32 %v1712, %v1724
    %v1726 = vpop.f32.mrf.mxu0
    %1727 = vdwg.mxu0
    %1728 = vmatpush.bf16.msra.mxu0 %v1204
    %1729 = vmatpush.bf16.msra.mxu0 %v1196
    %1730 = vmatpush.bf16.msra.mxu0 %v1188
    %1731 = vmatpush.bf16.msra.mxu0 %v1180
    %1732 = vmatpush.bf16.msra.mxu0 %v1172
    %1733 = vmatpush.bf16.msra.mxu0 %v1164
    %1734 = vmatpush.bf16.msra.mxu0 %v1156
    %1735 = vmatpush.bf16.msra.mxu0 %v1148
    %1736 = vmatmul.bf16.gmra.mxu0 %v111
    %v1737 = vpop.f32.mrf.mxu0
    %v1738 = vadd.f32 %v1661, %v1737
    %v1739 = vpop.f32.mrf.mxu0
    %1740 = vdwg.mxu0
    %1741 = vmatpush.bf16.msra.mxu0 %v1268
    %1742 = vmatpush.bf16.msra.mxu0 %v1260
    %1743 = vmatpush.bf16.msra.mxu0 %v1252
    %1744 = vmatpush.bf16.msra.mxu0 %v1244
    %1745 = vmatpush.bf16.msra.mxu0 %v1236
    %1746 = vmatpush.bf16.msra.mxu0 %v1228
    %1747 = vmatpush.bf16.msra.mxu0 %v1220
    %1748 = vmatpush.bf16.msra.mxu0 %v1212
    %1749 = vmatmul.bf16.gmra.mxu0 %v112
    %v1750 = vpop.f32.mrf.mxu0
    %v1751 = vadd.f32 %v1738, %v1750
    %v1752 = vpop.f32.mrf.mxu0
    %1753 = vdwg.mxu0
    %1754 = vmatpush.bf16.msra.mxu0 %v1332
    %1755 = vmatpush.bf16.msra.mxu0 %v1324
    %1756 = vmatpush.bf16.msra.mxu0 %v1316
    %1757 = vmatpush.bf16.msra.mxu0 %v1308
    %1758 = vmatpush.bf16.msra.mxu0 %v1300
    %1759 = vmatpush.bf16.msra.mxu0 %v1292
    %1760 = vmatpush.bf16.msra.mxu0 %v1284
    %1761 = vmatpush.bf16.msra.mxu0 %v1276
    %1762 = vmatmul.bf16.gmra.mxu0 %v118
    %v1763 = vpop.f32.mrf.mxu0
    %v1764 = vadd.f32 %v1751, %v1763
    %v1765 = vpop.f32.mrf.mxu0
    %1766 = vdwg.mxu0
    %1767 = vmatpush.bf16.msra.mxu0 %v1396
    %1768 = vmatpush.bf16.msra.mxu0 %v1388
    %1769 = vmatpush.bf16.msra.mxu0 %v1380
    %1770 = vmatpush.bf16.msra.mxu0 %v1372
    %1771 = vmatpush.bf16.msra.mxu0 %v1364
    %1772 = vmatpush.bf16.msra.mxu0 %v1356
    %1773 = vmatpush.bf16.msra.mxu0 %v1348
    %1774 = vmatpush.bf16.msra.mxu0 %v1340
    %1775 = vmatmul.bf16.gmra.mxu0 %v119
    %v1776 = vpop.f32.mrf.mxu0
    %v1777 = vadd.f32 %v1764, %v1776
    %v1778 = vpop.f32.mrf.mxu0
    %1779 = vdwg.mxu0
    %1780 = vmatpush.bf16.msra.mxu0 %v1205
    %1781 = vmatpush.bf16.msra.mxu0 %v1197
    %1782 = vmatpush.bf16.msra.mxu0 %v1189
    %1783 = vmatpush.bf16.msra.mxu0 %v1181
    %1784 = vmatpush.bf16.msra.mxu0 %v1173
    %1785 = vmatpush.bf16.msra.mxu0 %v1165
    %1786 = vmatpush.bf16.msra.mxu0 %v1157
    %1787 = vmatpush.bf16.msra.mxu0 %v1149
    %1788 = vmatmul.bf16.gmra.mxu0 %v111
    %v1789 = vpop.f32.mrf.mxu0
    %v1790 = vadd.f32 %v1662, %v1789
    %v1791 = vpop.f32.mrf.mxu0
    %1792 = vdwg.mxu0
    %1793 = vmatpush.bf16.msra.mxu0 %v1269
    %1794 = vmatpush.bf16.msra.mxu0 %v1261
    %1795 = vmatpush.bf16.msra.mxu0 %v1253
    %1796 = vmatpush.bf16.msra.mxu0 %v1245
    %1797 = vmatpush.bf16.msra.mxu0 %v1237
    %1798 = vmatpush.bf16.msra.mxu0 %v1229
    %1799 = vmatpush.bf16.msra.mxu0 %v1221
    %1800 = vmatpush.bf16.msra.mxu0 %v1213
    %1801 = vmatmul.bf16.gmra.mxu0 %v112
    %v1802 = vpop.f32.mrf.mxu0
    %v1803 = vadd.f32 %v1790, %v1802
    %v1804 = vpop.f32.mrf.mxu0
    %1805 = vdwg.mxu0
    %1806 = vmatpush.bf16.msra.mxu0 %v1333
    %1807 = vmatpush.bf16.msra.mxu0 %v1325
    %1808 = vmatpush.bf16.msra.mxu0 %v1317
    %1809 = vmatpush.bf16.msra.mxu0 %v1309
    %1810 = vmatpush.bf16.msra.mxu0 %v1301
    %1811 = vmatpush.bf16.msra.mxu0 %v1293
    %1812 = vmatpush.bf16.msra.mxu0 %v1285
    %1813 = vmatpush.bf16.msra.mxu0 %v1277
    %1814 = vmatmul.bf16.gmra.mxu0 %v118
    %v1815 = vpop.f32.mrf.mxu0
    %v1816 = vadd.f32 %v1803, %v1815
    %v1817 = vpop.f32.mrf.mxu0
    %1818 = vdwg.mxu0
    %1819 = vmatpush.bf16.msra.mxu0 %v1397
    %1820 = vmatpush.bf16.msra.mxu0 %v1389
    %1821 = vmatpush.bf16.msra.mxu0 %v1381
    %1822 = vmatpush.bf16.msra.mxu0 %v1373
    %1823 = vmatpush.bf16.msra.mxu0 %v1365
    %1824 = vmatpush.bf16.msra.mxu0 %v1357
    %1825 = vmatpush.bf16.msra.mxu0 %v1349
    %1826 = vmatpush.bf16.msra.mxu0 %v1341
    %1827 = vmatmul.bf16.gmra.mxu0 %v119
    %v1828 = vpop.f32.mrf.mxu0
    %v1829 = vadd.f32 %v1816, %v1828
    %v1830 = vpop.f32.mrf.mxu0
    %1831 = vdwg.mxu0
    %1832 = vmatpush.bf16.msra.mxu0 %v1206
    %1833 = vmatpush.bf16.msra.mxu0 %v1198
    %1834 = vmatpush.bf16.msra.mxu0 %v1190
    %1835 = vmatpush.bf16.msra.mxu0 %v1182
    %1836 = vmatpush.bf16.msra.mxu0 %v1174
    %1837 = vmatpush.bf16.msra.mxu0 %v1166
    %1838 = vmatpush.bf16.msra.mxu0 %v1158
    %1839 = vmatpush.bf16.msra.mxu0 %v1150
    %1840 = vmatmul.bf16.gmra.mxu0 %v111
    %v1841 = vpop.f32.mrf.mxu0
    %v1842 = vadd.f32 %v1663, %v1841
    %v1843 = vpop.f32.mrf.mxu0
    %1844 = vdwg.mxu0
    %1845 = vmatpush.bf16.msra.mxu0 %v1270
    %1846 = vmatpush.bf16.msra.mxu0 %v1262
    %1847 = vmatpush.bf16.msra.mxu0 %v1254
    %1848 = vmatpush.bf16.msra.mxu0 %v1246
    %1849 = vmatpush.bf16.msra.mxu0 %v1238
    %1850 = vmatpush.bf16.msra.mxu0 %v1230
    %1851 = vmatpush.bf16.msra.mxu0 %v1222
    %1852 = vmatpush.bf16.msra.mxu0 %v1214
    %1853 = vmatmul.bf16.gmra.mxu0 %v112
    %v1854 = vpop.f32.mrf.mxu0
    %v1855 = vadd.f32 %v1842, %v1854
    %v1856 = vpop.f32.mrf.mxu0
    %1857 = vdwg.mxu0
    %1858 = vmatpush.bf16.msra.mxu0 %v1334
    %1859 = vmatpush.bf16.msra.mxu0 %v1326
    %1860 = vmatpush.bf16.msra.mxu0 %v1318
    %1861 = vmatpush.bf16.msra.mxu0 %v1310
    %1862 = vmatpush.bf16.msra.mxu0 %v1302
    %1863 = vmatpush.bf16.msra.mxu0 %v1294
    %1864 = vmatpush.bf16.msra.mxu0 %v1286
    %1865 = vmatpush.bf16.msra.mxu0 %v1278
    %1866 = vmatmul.bf16.gmra.mxu0 %v118
    %v1867 = vpop.f32.mrf.mxu0
    %v1868 = vadd.f32 %v1855, %v1867
    %v1869 = vpop.f32.mrf.mxu0
    %1870 = vdwg.mxu0
    %1871 = vmatpush.bf16.msra.mxu0 %v1398
    %1872 = vmatpush.bf16.msra.mxu0 %v1390
    %1873 = vmatpush.bf16.msra.mxu0 %v1382
    %1874 = vmatpush.bf16.msra.mxu0 %v1374
    %1875 = vmatpush.bf16.msra.mxu0 %v1366
    %1876 = vmatpush.bf16.msra.mxu0 %v1358
    %1877 = vmatpush.bf16.msra.mxu0 %v1350
    %1878 = vmatpush.bf16.msra.mxu0 %v1342
    %1879 = vmatmul.bf16.gmra.mxu0 %v119
    %v1880 = vpop.f32.mrf.mxu0
    %v1881 = vadd.f32 %v1868, %v1880
    %v1882 = vpop.f32.mrf.mxu0
    %1883 = vdwg.mxu0
    %1884 = vmatpush.bf16.msra.mxu0 %v1207
    %1885 = vmatpush.bf16.msra.mxu0 %v1199
    %1886 = vmatpush.bf16.msra.mxu0 %v1191
    %1887 = vmatpush.bf16.msra.mxu0 %v1183
    %1888 = vmatpush.bf16.msra.mxu0 %v1175
    %1889 = vmatpush.bf16.msra.mxu0 %v1167
    %1890 = vmatpush.bf16.msra.mxu0 %v1159
    %1891 = vmatpush.bf16.msra.mxu0 %v1151
    %1892 = vmatmul.bf16.gmra.mxu0 %v111
    %v1893 = vpop.f32.mrf.mxu0
    %v1894 = vadd.f32 %v1664, %v1893
    %v1895 = vpop.f32.mrf.mxu0
    %1896 = vdwg.mxu0
    %1897 = vmatpush.bf16.msra.mxu0 %v1271
    %1898 = vmatpush.bf16.msra.mxu0 %v1263
    %1899 = vmatpush.bf16.msra.mxu0 %v1255
    %1900 = vmatpush.bf16.msra.mxu0 %v1247
    %1901 = vmatpush.bf16.msra.mxu0 %v1239
    %1902 = vmatpush.bf16.msra.mxu0 %v1231
    %1903 = vmatpush.bf16.msra.mxu0 %v1223
    %1904 = vmatpush.bf16.msra.mxu0 %v1215
    %1905 = vmatmul.bf16.gmra.mxu0 %v112
    %v1906 = vpop.f32.mrf.mxu0
    %v1907 = vadd.f32 %v1894, %v1906
    %v1908 = vpop.f32.mrf.mxu0
    %1909 = vdwg.mxu0
    %1910 = vmatpush.bf16.msra.mxu0 %v1335
    %1911 = vmatpush.bf16.msra.mxu0 %v1327
    %1912 = vmatpush.bf16.msra.mxu0 %v1319
    %1913 = vmatpush.bf16.msra.mxu0 %v1311
    %1914 = vmatpush.bf16.msra.mxu0 %v1303
    %1915 = vmatpush.bf16.msra.mxu0 %v1295
    %1916 = vmatpush.bf16.msra.mxu0 %v1287
    %1917 = vmatpush.bf16.msra.mxu0 %v1279
    %1918 = vmatmul.bf16.gmra.mxu0 %v118
    %v1919 = vpop.f32.mrf.mxu0
    %v1920 = vadd.f32 %v1907, %v1919
    %v1921 = vpop.f32.mrf.mxu0
    %1922 = vdwg.mxu0
    %1923 = vmatpush.bf16.msra.mxu0 %v1399
    %1924 = vmatpush.bf16.msra.mxu0 %v1391
    %1925 = vmatpush.bf16.msra.mxu0 %v1383
    %1926 = vmatpush.bf16.msra.mxu0 %v1375
    %1927 = vmatpush.bf16.msra.mxu0 %v1367
    %1928 = vmatpush.bf16.msra.mxu0 %v1359
    %1929 = vmatpush.bf16.msra.mxu0 %v1351
    %1930 = vmatpush.bf16.msra.mxu0 %v1343
    %1931 = vmatmul.bf16.gmra.mxu0 %v119
    %v1932 = vpop.f32.mrf.mxu0
    %v1933 = vadd.f32 %v1920, %v1932
    %v1934 = vpop.f32.mrf.mxu0
    %1935 = vdwg.mxu0
    %1936 = vmatpush.bf16.msra.mxu0 %v1208
    %1937 = vmatpush.bf16.msra.mxu0 %v1200
    %1938 = vmatpush.bf16.msra.mxu0 %v1192
    %1939 = vmatpush.bf16.msra.mxu0 %v1184
    %1940 = vmatpush.bf16.msra.mxu0 %v1176
    %1941 = vmatpush.bf16.msra.mxu0 %v1168
    %1942 = vmatpush.bf16.msra.mxu0 %v1160
    %1943 = vmatpush.bf16.msra.mxu0 %v1152
    %1944 = vmatmul.bf16.gmra.mxu0 %v111
    %v1945 = vpop.f32.mrf.mxu0
    %v1946 = vadd.f32 %v1665, %v1945
    %v1947 = vpop.f32.mrf.mxu0
    %1948 = vdwg.mxu0
    %1949 = vmatpush.bf16.msra.mxu0 %v1272
    %1950 = vmatpush.bf16.msra.mxu0 %v1264
    %1951 = vmatpush.bf16.msra.mxu0 %v1256
    %1952 = vmatpush.bf16.msra.mxu0 %v1248
    %1953 = vmatpush.bf16.msra.mxu0 %v1240
    %1954 = vmatpush.bf16.msra.mxu0 %v1232
    %1955 = vmatpush.bf16.msra.mxu0 %v1224
    %1956 = vmatpush.bf16.msra.mxu0 %v1216
    %1957 = vmatmul.bf16.gmra.mxu0 %v112
    %v1958 = vpop.f32.mrf.mxu0
    %v1959 = vadd.f32 %v1946, %v1958
    %v1960 = vpop.f32.mrf.mxu0
    %1961 = vdwg.mxu0
    %1962 = vmatpush.bf16.msra.mxu0 %v1336
    %1963 = vmatpush.bf16.msra.mxu0 %v1328
    %1964 = vmatpush.bf16.msra.mxu0 %v1320
    %1965 = vmatpush.bf16.msra.mxu0 %v1312
    %1966 = vmatpush.bf16.msra.mxu0 %v1304
    %1967 = vmatpush.bf16.msra.mxu0 %v1296
    %1968 = vmatpush.bf16.msra.mxu0 %v1288
    %1969 = vmatpush.bf16.msra.mxu0 %v1280
    %1970 = vmatmul.bf16.gmra.mxu0 %v118
    %v1971 = vpop.f32.mrf.mxu0
    %v1972 = vadd.f32 %v1959, %v1971
    %v1973 = vpop.f32.mrf.mxu0
    %1974 = vdwg.mxu0
    %1975 = vmatpush.bf16.msra.mxu0 %v1400
    %1976 = vmatpush.bf16.msra.mxu0 %v1392
    %1977 = vmatpush.bf16.msra.mxu0 %v1384
    %1978 = vmatpush.bf16.msra.mxu0 %v1376
    %1979 = vmatpush.bf16.msra.mxu0 %v1368
    %1980 = vmatpush.bf16.msra.mxu0 %v1360
    %1981 = vmatpush.bf16.msra.mxu0 %v1352
    %1982 = vmatpush.bf16.msra.mxu0 %v1344
    %1983 = vmatmul.bf16.gmra.mxu0 %v119
    %v1984 = vpop.f32.mrf.mxu0
    %v1985 = vadd.f32 %v1972, %v1984
    %v1986 = vpop.f32.mrf.mxu0
    %1987 = vdwg.mxu0
    %1988 = vmatpush.bf16.msra.mxu0 %v1209
    %1989 = vmatpush.bf16.msra.mxu0 %v1201
    %1990 = vmatpush.bf16.msra.mxu0 %v1193
    %1991 = vmatpush.bf16.msra.mxu0 %v1185
    %1992 = vmatpush.bf16.msra.mxu0 %v1177
    %1993 = vmatpush.bf16.msra.mxu0 %v1169
    %1994 = vmatpush.bf16.msra.mxu0 %v1161
    %1995 = vmatpush.bf16.msra.mxu0 %v1153
    %1996 = vmatmul.bf16.gmra.mxu0 %v111
    %v1997 = vpop.f32.mrf.mxu0
    %v1998 = vadd.f32 %v1666, %v1997
    %v1999 = vpop.f32.mrf.mxu0
    %2000 = vdwg.mxu0
    %2001 = vmatpush.bf16.msra.mxu0 %v1273
    %2002 = vmatpush.bf16.msra.mxu0 %v1265
    %2003 = vmatpush.bf16.msra.mxu0 %v1257
    %2004 = vmatpush.bf16.msra.mxu0 %v1249
    %2005 = vmatpush.bf16.msra.mxu0 %v1241
    %2006 = vmatpush.bf16.msra.mxu0 %v1233
    %2007 = vmatpush.bf16.msra.mxu0 %v1225
    %2008 = vmatpush.bf16.msra.mxu0 %v1217
    %2009 = vmatmul.bf16.gmra.mxu0 %v112
    %v2010 = vpop.f32.mrf.mxu0
    %v2011 = vadd.f32 %v1998, %v2010
    %v2012 = vpop.f32.mrf.mxu0
    %2013 = vdwg.mxu0
    %2014 = vmatpush.bf16.msra.mxu0 %v1337
    %2015 = vmatpush.bf16.msra.mxu0 %v1329
    %2016 = vmatpush.bf16.msra.mxu0 %v1321
    %2017 = vmatpush.bf16.msra.mxu0 %v1313
    %2018 = vmatpush.bf16.msra.mxu0 %v1305
    %2019 = vmatpush.bf16.msra.mxu0 %v1297
    %2020 = vmatpush.bf16.msra.mxu0 %v1289
    %2021 = vmatpush.bf16.msra.mxu0 %v1281
    %2022 = vmatmul.bf16.gmra.mxu0 %v118
    %v2023 = vpop.f32.mrf.mxu0
    %v2024 = vadd.f32 %v2011, %v2023
    %v2025 = vpop.f32.mrf.mxu0
    %2026 = vdwg.mxu0
    %2027 = vmatpush.bf16.msra.mxu0 %v1401
    %2028 = vmatpush.bf16.msra.mxu0 %v1393
    %2029 = vmatpush.bf16.msra.mxu0 %v1385
    %2030 = vmatpush.bf16.msra.mxu0 %v1377
    %2031 = vmatpush.bf16.msra.mxu0 %v1369
    %2032 = vmatpush.bf16.msra.mxu0 %v1361
    %2033 = vmatpush.bf16.msra.mxu0 %v1353
    %2034 = vmatpush.bf16.msra.mxu0 %v1345
    %2035 = vmatmul.bf16.gmra.mxu0 %v119
    %v2036 = vpop.f32.mrf.mxu0
    %v2037 = vadd.f32 %v2024, %v2036
    %v2038 = vpop.f32.mrf.mxu0
    %2039 = vdwg.mxu0
    %2040 = vmatpush.bf16.msra.mxu0 %v1210
    %2041 = vmatpush.bf16.msra.mxu0 %v1202
    %2042 = vmatpush.bf16.msra.mxu0 %v1194
    %2043 = vmatpush.bf16.msra.mxu0 %v1186
    %2044 = vmatpush.bf16.msra.mxu0 %v1178
    %2045 = vmatpush.bf16.msra.mxu0 %v1170
    %2046 = vmatpush.bf16.msra.mxu0 %v1162
    %2047 = vmatpush.bf16.msra.mxu0 %v1154
    %2048 = vmatmul.bf16.gmra.mxu0 %v111
    %v2049 = vpop.f32.mrf.mxu0
    %v2050 = vadd.f32 %v1667, %v2049
    %v2051 = vpop.f32.mrf.mxu0
    %2052 = vdwg.mxu0
    %2053 = vmatpush.bf16.msra.mxu0 %v1274
    %2054 = vmatpush.bf16.msra.mxu0 %v1266
    %2055 = vmatpush.bf16.msra.mxu0 %v1258
    %2056 = vmatpush.bf16.msra.mxu0 %v1250
    %2057 = vmatpush.bf16.msra.mxu0 %v1242
    %2058 = vmatpush.bf16.msra.mxu0 %v1234
    %2059 = vmatpush.bf16.msra.mxu0 %v1226
    %2060 = vmatpush.bf16.msra.mxu0 %v1218
    %2061 = vmatmul.bf16.gmra.mxu0 %v112
    %v2062 = vpop.f32.mrf.mxu0
    %v2063 = vadd.f32 %v2050, %v2062
    %v2064 = vpop.f32.mrf.mxu0
    %2065 = vdwg.mxu0
    %2066 = vmatpush.bf16.msra.mxu0 %v1338
    %2067 = vmatpush.bf16.msra.mxu0 %v1330
    %2068 = vmatpush.bf16.msra.mxu0 %v1322
    %2069 = vmatpush.bf16.msra.mxu0 %v1314
    %2070 = vmatpush.bf16.msra.mxu0 %v1306
    %2071 = vmatpush.bf16.msra.mxu0 %v1298
    %2072 = vmatpush.bf16.msra.mxu0 %v1290
    %2073 = vmatpush.bf16.msra.mxu0 %v1282
    %2074 = vmatmul.bf16.gmra.mxu0 %v118
    %v2075 = vpop.f32.mrf.mxu0
    %v2076 = vadd.f32 %v2063, %v2075
    %v2077 = vpop.f32.mrf.mxu0
    %2078 = vdwg.mxu0
    %2079 = vmatpush.bf16.msra.mxu0 %v1402
    %2080 = vmatpush.bf16.msra.mxu0 %v1394
    %2081 = vmatpush.bf16.msra.mxu0 %v1386
    %2082 = vmatpush.bf16.msra.mxu0 %v1378
    %2083 = vmatpush.bf16.msra.mxu0 %v1370
    %2084 = vmatpush.bf16.msra.mxu0 %v1362
    %2085 = vmatpush.bf16.msra.mxu0 %v1354
    %2086 = vmatpush.bf16.msra.mxu0 %v1346
    %2087 = vmatmul.bf16.gmra.mxu0 %v119
    %v2088 = vpop.f32.mrf.mxu0
    %v2089 = vadd.f32 %v2076, %v2088
    %v2090 = vpop.f32.mrf.mxu0
    %2091 = vdwg.mxu0
    %v2092 = vxor.u32 %v1725, 2147483648
    %v2093 = vxor.u32 %v1777, 2147483648
    %v2094 = vmul.f32 %v2092, 1.442695
    %v2095 = vpow.pop %v2094
    %v2096 = vmul.f32 %v2093, 1.442695
    %v2097 = vpow.pop %v2096
    %v2098 = vadd.f32 %v2095, 1.0
    %v2099 = vadd.f32 %v2097, 1.0
    %v2100 = vrcp.pop %v2098
    %v2101 = vmul.f32 %v2098, %v2100
    %v2102 = vsub.f32 1.0, %v2101
    %v2103 = vmul.f32 %v2100, %v2102
    %v2104 = vadd.f32 %v2100, %v2103
    %vm2105 = vweird.f32 %v2098
    %vm2106 = vweird.f32 %v2100
    %vm2107 = vmor %vm2105, %vm2106
    %v2108 = vsel %vm2107, %v2100, %v2104
    %v2109 = vand.u32 2147483647, %v2098
    %vm2110 = vcmp.eq.f32.partialorder %v2109, 8.507059e+37
    %v2111 = vand.u32 %v2098, 2147483648
    %v2112 = vor.u32 1.1754944e-38, %v2111
    %v2113 = vsel %vm2110, %v2112, %v2108
    %v2114 = vmul.f32 1.0, %v2113
    %v2115 = vrcp.pop %v2099
    %v2116 = vmul.f32 %v2099, %v2115
    %v2117 = vsub.f32 1.0, %v2116
    %v2118 = vmul.f32 %v2115, %v2117
    %v2119 = vadd.f32 %v2115, %v2118
    %vm2120 = vweird.f32 %v2099
    %vm2121 = vweird.f32 %v2115
    %vm2122 = vmor %vm2120, %vm2121
    %v2123 = vsel %vm2122, %v2115, %v2119
    %v2124 = vand.u32 2147483647, %v2099
    %vm2125 = vcmp.eq.f32.partialorder %v2124, 8.507059e+37
    %v2126 = vand.u32 %v2099, 2147483648
    %v2127 = vor.u32 1.1754944e-38, %v2126
    %v2128 = vsel %vm2125, %v2127, %v2123
    %v2129 = vmul.f32 1.0, %v2128
    %v2130 = vxor.u32 %v1829, 2147483648
    %v2131 = vxor.u32 %v1881, 2147483648
    %v2132 = vmul.f32 %v2130, 1.442695
    %v2133 = vpow.pop %v2132
    %v2134 = vmul.f32 %v2131, 1.442695
    %v2135 = vpow.pop %v2134
    %v2136 = vadd.f32 %v2133, 1.0
    %v2137 = vadd.f32 %v2135, 1.0
    %v2138 = vrcp.pop %v2136
    %v2139 = vmul.f32 %v2136, %v2138
    %v2140 = vsub.f32 1.0, %v2139
    %v2141 = vmul.f32 %v2138, %v2140
    %v2142 = vadd.f32 %v2138, %v2141
    %vm2143 = vweird.f32 %v2136
    %vm2144 = vweird.f32 %v2138
    %vm2145 = vmor %vm2143, %vm2144
    %v2146 = vsel %vm2145, %v2138, %v2142
    %v2147 = vand.u32 2147483647, %v2136
    %vm2148 = vcmp.eq.f32.partialorder %v2147, 8.507059e+37
    %v2149 = vand.u32 %v2136, 2147483648
    %v2150 = vor.u32 1.1754944e-38, %v2149
    %v2151 = vsel %vm2148, %v2150, %v2146
    %v2152 = vmul.f32 1.0, %v2151
    %v2153 = vrcp.pop %v2137
    %v2154 = vmul.f32 %v2137, %v2153
    %v2155 = vsub.f32 1.0, %v2154
    %v2156 = vmul.f32 %v2153, %v2155
    %v2157 = vadd.f32 %v2153, %v2156
    %vm2158 = vweird.f32 %v2137
    %vm2159 = vweird.f32 %v2153
    %vm2160 = vmor %vm2158, %vm2159
    %v2161 = vsel %vm2160, %v2153, %v2157
    %v2162 = vand.u32 2147483647, %v2137
    %vm2163 = vcmp.eq.f32.partialorder %v2162, 8.507059e+37
    %v2164 = vand.u32 %v2137, 2147483648
    %v2165 = vor.u32 1.1754944e-38, %v2164
    %v2166 = vsel %vm2163, %v2165, %v2161
    %v2167 = vmul.f32 1.0, %v2166
    %v2168 = vtanh.pop %v1933
    %v2169 = vtanh.pop %v1985
    %v2170 = vxor.u32 %v2037, 2147483648
    %v2171 = vxor.u32 %v2089, 2147483648
    %v2172 = vmul.f32 %v2170, 1.442695
    %v2173 = vpow.pop %v2172
    %v2174 = vmul.f32 %v2171, 1.442695
    %v2175 = vpow.pop %v2174
    %v2176 = vadd.f32 %v2173, 1.0
    %v2177 = vadd.f32 %v2175, 1.0
    %v2178 = vrcp.pop %v2176
    %v2179 = vmul.f32 %v2176, %v2178
    %v2180 = vsub.f32 1.0, %v2179
    %v2181 = vmul.f32 %v2178, %v2180
    %v2182 = vadd.f32 %v2178, %v2181
    %vm2183 = vweird.f32 %v2176
    %vm2184 = vweird.f32 %v2178
    %vm2185 = vmor %vm2183, %vm2184
    %v2186 = vsel %vm2185, %v2178, %v2182
    %v2187 = vand.u32 2147483647, %v2176
    %vm2188 = vcmp.eq.f32.partialorder %v2187, 8.507059e+37
    %v2189 = vand.u32 %v2176, 2147483648
    %v2190 = vor.u32 1.1754944e-38, %v2189
    %v2191 = vsel %vm2188, %v2190, %v2186
    %v2192 = vmul.f32 1.0, %v2191
    %v2193 = vrcp.pop %v2177
    %v2194 = vmul.f32 %v2177, %v2193
    %v2195 = vsub.f32 1.0, %v2194
    %v2196 = vmul.f32 %v2193, %v2195
    %v2197 = vadd.f32 %v2193, %v2196
    %vm2198 = vweird.f32 %v2177
    %vm2199 = vweird.f32 %v2193
    %vm2200 = vmor %vm2198, %vm2199
    %v2201 = vsel %vm2200, %v2193, %v2197
    %v2202 = vand.u32 2147483647, %v2177
    %vm2203 = vcmp.eq.f32.partialorder %v2202, 8.507059e+37
    %v2204 = vand.u32 %v2177, 2147483648
    %v2205 = vor.u32 1.1754944e-38, %v2204
    %v2206 = vsel %vm2203, %v2205, %v2201
    %v2207 = vmul.f32 1.0, %v2206
    %v2208 = vld [vmem:[#allocation7] sm:$0x3]
    %v2210 = vperm.slane %v2208, 0
    %v2211 = vperm.slane %v2208, 1
    %v2214 = vmul.f32 %v2152, %v2210
    %v2215 = vmul.f32 %v2167, %v2211
    %v2216 = vmul.f32 %v2114, %v2168
    %v2217 = vmul.f32 %v2129, %v2169
    %v2218 = vadd.f32 %v2214, %v2216
    %v2219 = vadd.f32 %v2215, %v2217
    %v2220 = vtanh.pop %v2218
    %v2221 = vtanh.pop %v2219
    %v2222 = vmul.f32 %v2192, %v2220
    %v2223 = vmul.f32 %v2207, %v2221
    %v2226 = vrot.slane %v2223, 7
    %vm2227 = vcmask 1040384
    %v2228 = vsel %vm2227, %v2222, %v2226
    %v2230 = vlaneseq
    %vm2231 = vcmp.ge.s32.totalorder %v2230, 0
    %vm2232 = vcmp.lt.s32.totalorder %v2230, 256
    %vm2233 = vmand %vm2231, %vm2232
    %2234 = vst.msk [vmem:[#allocation11] sm:$0x3] %vm2233, %v2228
    %v2237 = vrot.slane %v2219, 7
    %v2238 = vsel %vm2227, %v2218, %v2237
    %2240 = vst.msk [vmem:[#allocation12] sm:$0x3] %vm2233, %v2238
    // Predicated region
    $region42: #{lstm_step_pallas.1} parent=1 // pred_check
      _
    $region43: #{lstm_step_pallas.1} parent=1 // pred_check_branch
      %2242 = sbr.rel (0) target = $region45
    $region44: #{lstm_step_pallas.1} parent=1 // pred_region
      %2244 = vsyncadd [#allocation4], 0
      %s2246 = sshll.u32 [#allocation11], 4
      %s2247 = int_to_ptr.vmem [resolvable:$true] %s2246
      %s2248 = sshll.u32 %s5, 4
      %s2249 = int_to_ptr.hbm [resolvable:$true] %s2248
      %2251 = dma.vmem_to_hbm [thread:$0]  %s2247, 32, %s2249, [#allocation4]
    $region45: #{lstm_step_pallas.1} parent=1 // pred_fallthru
      _
    // Predicated region
    $region46: #{lstm_step_pallas.1} parent=1 // pred_check
      _
    $region47: #{lstm_step_pallas.1} parent=1 // pred_check_branch
      %2253 = sbr.rel (0) target = $region49
    $region48: #{lstm_step_pallas.1} parent=1 // pred_region
      %2255 = vsyncadd [#allocation13], 0
      %s2257 = sshll.u32 [#allocation12], 4
      %s2258 = int_to_ptr.vmem [resolvable:$true] %s2257
      %s2259 = sshll.u32 %s6, 4
      %s2260 = int_to_ptr.hbm [resolvable:$true] %s2259
      %2262 = dma.vmem_to_hbm [thread:$0]  %s2258, 32, %s2260, [#allocation13]
    $region49: #{lstm_step_pallas.1} parent=1 // pred_fallthru
      _
    // Predicated region
    $region50: #{lstm_step_pallas.1} parent=1 // pred_check
      _
    $region51: #{lstm_step_pallas.1} parent=1 // pred_check_branch
      %2264 = sbr.rel (0) target = $region53
    $region52: #{lstm_step_pallas.1} parent=1 // pred_region
      %2266 = dma.done [#allocation4], 32
    $region53: #{lstm_step_pallas.1} parent=1 // pred_fallthru
      _
    // Predicated region
    $region54: #{lstm_step_pallas.1} parent=1 // pred_check
      _
    $region55: #{lstm_step_pallas.1} parent=1 // pred_check_branch
      %2268 = sbr.rel (0) target = $region57
    $region56: #{lstm_step_pallas.1} parent=1 // pred_region
      %2270 = dma.done [#allocation13], 32
    $region57: #{lstm_step_pallas.1} parent=1 // pred_fallthru
      _
    %2271 = vsyncpa [#allocation3], 1
    %2272 = vsyncpa [#allocation6], 1
    %2273 = vsyncpa [#allocation9], 1
    %2274 = vsyncpa [#allocation4], 1
    %2275 = vsyncpa [#allocation13], 1

</llo_original>
